<compile_context>
chip_gen: v5e
topology: v5e:2x2
jax: 0.10.0
libtpu: 0.0.40
codegen_flags: <defaults>
</compile_context>

<pallas_src>
import math

import jax
import jax.numpy as jnp
import numpy as np
from jax.experimental import pallas as pl
from jax.experimental.pallas import tpu as pltpu


def _make_downsample_kernel(we, mo):
    """`we` = row stride (= Wo + 1) of the flattened parity planes,
    `mo` = tr * we = flattened output rows per grid step (column Wo is junk)."""

    def kernel(xp_ref, w_ref, b_ref, o_ref, acc_ref):
        # xp_ref : (1, 4, Mpt, C)  four parity planes of this row tile, flattened
        # w_ref  : (9, C, tn)      per-tap weights, tap t = kh*3 + kw
        # b_ref  : (1, tn)         f32 bias (padded to the Cout tile)
        # o_ref  : (1, mo, tn)     output block, tn % 128 == 0 -> lane-dense stores
        # acc_ref: (mo, tn) f32    VMEM accumulator
        acc_ref[...] = jnp.broadcast_to(b_ref[...], acc_ref.shape)   # bias init
        for t in range(9):                      # static unroll: 9 MXU matmuls
            kh, kw = divmod(t, 3)
            p = (kh % 2) * 2 + (kw % 2)         # which parity plane feeds this tap
            off = (kh // 2) * we + (kw // 2)    # constant row offset of the tap
            lhs = xp_ref[0, p, pl.ds(off, mo), :]          # (mo, C) tap window
            acc_ref[...] += jnp.dot(lhs, w_ref[t],
                                    preferred_element_type=jnp.float32)
        o_ref[0] = acc_ref[...].astype(o_ref.dtype)

    return kernel


def downsample_conv2d(x, weight, bias, *, compute_dtype=None, row_tile=None):
    """Equivalent of torch.nn.Conv2d(dim, dim, 3, stride=2, padding=1)(x).

    x: (N, C, H, W);  weight: (Cout, Cin, 3, 3) OIHW;  bias: (Cout,).
    compute_dtype: optional matmul input dtype (e.g. jnp.bfloat16 on v6e/v7x);
    accumulation is always f32.  row_tile: output rows per grid step (None = auto).
    Returns (N, Cout, Ho, Wo) in x.dtype.
    """
    N, C, H, W = x.shape
    Cout, Cin, KH, KW = weight.shape
    assert Cin == C and KH == 3 and KW == 3

    Ho = (H - 1) // 2 + 1              # = (H + 2*1 - 3)//2 + 1
    Wo = (W - 1) // 2 + 1
    We = Wo + 1                        # +1 junk column keeps every tap window affine

    out_dtype = x.dtype
    cdt = jnp.dtype(compute_dtype) if compute_dtype is not None else jnp.dtype(x.dtype)
    itm = cdt.itemsize
    out_itm = jnp.dtype(out_dtype).itemsize

    # ---- Cout padding + tile sizes -------------------------------------------------
    Coutp = ((Cout + 127) // 128) * 128
    budget = 28 << 20                  # target VMEM working set per grid step
    tn = 128                           # lane-dense Cout tile
    for cand in (512, 256):
        if Coutp % cand == 0 and 2 * 9 * C * cand * itm <= budget // 4:
            tn = cand
            break
    nj = Coutp // tn

    def _vmem_need(tr):
        mpt, mot = (tr + 2) * We, tr * We
        return (2 * (4 * mpt * C * itm      # parity block (double-buffered)
                     + 9 * C * tn * itm     # weight block
                     + 4 * tn               # bias block
                     + mot * tn * out_itm)  # output block
                + mot * tn * 4)             # f32 accumulator scratch

    tr = Ho if row_tile is None else max(1, min(int(row_tile), Ho))
    if row_tile is None:
        while tr > 1 and _vmem_need(tr) > budget:
            tr = (tr + 1) // 2
    R = -(-Ho // tr)                   # row tiles per image
    Hop = R * tr                       # padded output-row count
    Mpt = (tr + 2) * We                # parity-plane rows per row tile (incl. halo)
    MOt = tr * We                      # flattened output rows per grid step
    NR = N * R

    # ---- wrapper glue: NCHW -> padded NHWC -> 4 parity planes (no data blowup) -----
    x_nhwc = jnp.transpose(x, (0, 2, 3, 1))
    rows = Hop + 2                      # parity-plane rows per plane (global)
    pad_h = 2 * rows - (H + 2)          # extra zero rows below the bottom pad row
    pad_w = 2 * We - (W + 2)
    xp = jnp.pad(x_nhwc, ((0, 0), (1, 1 + pad_h), (1, 1 + pad_w), (0, 0)))
    plane = jnp.stack(
        [xp[:, 0::2, 0::2], xp[:, 0::2, 1::2],
         xp[:, 1::2, 0::2], xp[:, 1::2, 1::2]], axis=1).astype(cdt)  # (N,4,rows,We,C)
    if R == 1:
        tiles = plane.reshape(N, 4, rows * We, C)            # rows == tr + 2 here
    else:                               # bake the 2-row halo into each row tile
        tiles = jnp.stack([plane[:, :, r * tr: r * tr + tr + 2] for r in range(R)],
                          axis=1).reshape(NR, 4, Mpt, C)

    # ---- weights: OIHW -> (9, Cin, Coutp); bias -> f32 (1, Coutp) -------------------
    w_taps = jnp.transpose(weight, (2, 3, 1, 0)).reshape(9, C, Cout)
    w_taps = jnp.pad(w_taps, ((0, 0), (0, 0), (0, Coutp - Cout))).astype(cdt)
    b_pad = jnp.pad(bias.astype(jnp.float32), (0, Coutp - Cout)).reshape(1, Coutp)

    kernel = _make_downsample_kernel(We, MOt)
    vmem_limit = int(min(max(_vmem_need(tr) + (8 << 20), 32 << 20), 64 << 20))
    cost = pl.CostEstimate(
        flops=2 * NR * MOt * 9 * C * Coutp,
        transcendentals=0,
        bytes_accessed=int(tiles.size * itm + w_taps.size * itm + b_pad.size * 4
                           + NR * MOt * Coutp * out_itm))

    out_flat = pl.pallas_call(
        kernel,
        out_shape=jax.ShapeDtypeStruct((NR, MOt, Coutp), out_dtype),
        grid_spec=pltpu.PrefetchScalarGridSpec(
            num_scalar_prefetch=0,
            grid=(NR, nj),                 # j fastest -> parity block stays resident
            in_specs=[
                pl.BlockSpec((1, 4, Mpt, C), lambda i, j: (i, 0, 0, 0)),
                pl.BlockSpec((9, C, tn), lambda i, j: (0, 0, j)),
                pl.BlockSpec((1, tn), lambda i, j: (0, j)),
            ],
            out_specs=pl.BlockSpec((1, MOt, tn), lambda i, j: (i, 0, j)),
            scratch_shapes=[pltpu.VMEM((MOt, tn), jnp.float32)],
        ),
        compiler_params=pltpu.CompilerParams(
            dimension_semantics=("parallel", "parallel"),
            vmem_limit_bytes=vmem_limit),
        cost_estimate=cost,
    )(tiles, w_taps, b_pad)

    # (NR, MOt, Coutp) -> (N, Hop, We, Coutp) -> drop junk rows/col & Cout pad -> NCHW
    out = out_flat.reshape(N, Hop, We, Coutp)[:, :Ho, :Wo, :Cout]
    return jnp.transpose(out, (0, 3, 1, 2))


if __name__ == "__main__":
    # Downsample(dim=4) on a (2, 4, 16, 16) NCHW input.
    N, C, H, W = 2, 4, 16, 16
    key = jax.random.PRNGKey(0)
    kx, kw, kb = jax.random.split(key, 3)

    x = jax.random.normal(kx, (N, C, H, W), dtype=jnp.float32)
    fan_in = C * 3 * 3
    bound = 1.0 / math.sqrt(fan_in)
    weight = jax.random.uniform(kw, (C, C, 3, 3), jnp.float32, -bound, bound)
    bias = jax.random.uniform(kb, (C,), jnp.float32, -bound, bound)

    # Reference: XLA conv with the same semantics as torch.nn.Conv2d(dim, dim, 3, 2, 1).
    ref = jax.lax.conv_general_dilated(
        x, weight, window_strides=(2, 2), padding=((1, 1), (1, 1)),
        dimension_numbers=("NCHW", "OIHW", "NCHW"),
    ) + bias[None, :, None, None]

    fwd = jax.jit(downsample_conv2d, static_argnames=("compute_dtype", "row_tile"))

    # 1) Default path: whole image per grid step (row tiling degenerates to R=1).
    out = jax.block_until_ready(fwd(x, weight, bias))
    assert out.shape == (N, C, 8, 8), out.shape
    np.testing.assert_allclose(np.asarray(out), np.asarray(ref), rtol=1e-4, atol=1e-4)

    # 2) Forced row tiling (exercises the halo'd multi-tile path used for large images).
    out_tiled = jax.block_until_ready(fwd(x, weight, bias, row_tile=3))
    np.testing.assert_allclose(np.asarray(out_tiled), np.asarray(ref), rtol=1e-4, atol=1e-4)

    # 3) bf16-input / f32-accumulation fast path (v6e/v7x) -- loose tolerance check.
    out_bf16 = jax.block_until_ready(fwd(x, weight, bias, compute_dtype=jnp.bfloat16))
    np.testing.assert_allclose(np.asarray(out_bf16), np.asarray(ref), rtol=1e-1, atol=1e-1)

    print("KERNEL_OK")
</pallas_src>

<mosaic_0001>
module attributes {stable_mosaic.version = 11 : i64} {
  func.func @kernel(%arg0: i32, %arg1: i32, %arg2: memref<1x4x90x4xf32, #tpu.memory_space<vmem>>, %arg3: memref<9x4x128xf32, #tpu.memory_space<vmem>>, %arg4: memref<1x128xf32, #tpu.memory_space<vmem>>, %arg5: memref<1x72x128xf32, #tpu.memory_space<vmem>>, %arg6: memref<72x128xf32, #tpu.memory_space<vmem>>) attributes {dimension_semantics = [#tpu.dimension_semantics<parallel>, #tpu.dimension_semantics<parallel>], iteration_bounds = array<i64: 2, 1>, scalar_prefetch = 0 : i64, scratch_operands = 1 : i64, tpu.core_type = #tpu.core_type<tc>, window_params = [{transform_indices = @transform_0, window_bounds = array<i64: 1, 4, 90, 4>}, {transform_indices = @transform_1, window_bounds = array<i64: 9, 4, 128>}, {transform_indices = @transform_2, window_bounds = array<i64: 1, 128>}, {transform_indices = @transform_3, window_bounds = array<i64: 1, 72, 128>}]} {
    %c0 = arith.constant 0 : index
    %c0_0 = arith.constant 0 : index
    %0 = vector.load %arg4[%c0, %c0_0] : memref<1x128xf32, #tpu.memory_space<vmem>>, vector<1x128xf32>
    %1 = vector.shape_cast %0 : vector<1x128xf32> to vector<1x128xf32>
    %2 = vector.broadcast %1 : vector<1x128xf32> to vector<72x128xf32>
    %c0_1 = arith.constant 0 : index
    %c0_2 = arith.constant 0 : index
    %3 = vector.load %arg6[%c0_1, %c0_2] : memref<72x128xf32, #tpu.memory_space<vmem>>, vector<72x128xf32>
    tpu.vector_store %arg6[%c0_1, %c0_2], %2 {strides = array<i32>} : memref<72x128xf32, #tpu.memory_space<vmem>>, vector<72x128xf32>,
    %c0_3 = arith.constant 0 : index
    %c0_4 = arith.constant 0 : index
    %c0_5 = arith.constant 0 : index
    %c0_6 = arith.constant 0 : index
    %4 = vector.load %arg2[%c0_3, %c0_4, %c0_5, %c0_6] : memref<1x4x90x4xf32, #tpu.memory_space<vmem>>, vector<1x1x72x4xf32>
    %5 = vector.shape_cast %4 : vector<1x1x72x4xf32> to vector<72x4xf32>
    %c0_7 = arith.constant 0 : index
    %c0_8 = arith.constant 0 : index
    %6 = vector.load %arg6[%c0_7, %c0_8] : memref<72x128xf32, #tpu.memory_space<vmem>>, vector<72x128xf32>
    %c0_9 = arith.constant 0 : index
    %c0_10 = arith.constant 0 : index
    %c0_11 = arith.constant 0 : index
    %7 = vector.load %arg3[%c0_9, %c0_10, %c0_11] : memref<9x4x128xf32, #tpu.memory_space<vmem>>, vector<1x4x128xf32>
    %8 = vector.shape_cast %7 : vector<1x4x128xf32> to vector<4x128xf32>
    %cst = arith.constant dense<0.000000e+00> : vector<72x128xf32>
    %9 = tpu.matmul %5, %8, %cst {dimension_numbers = #tpu.dot_dimension_numbers<[1], [0], [0], [1], [0, 0, 1, 1], [], []>} : vector<72x4xf32>, vector<4x128xf32>, vector<72x128xf32> -> vector<72x128xf32>
    %10 = arith.addf %6, %9 : vector<72x128xf32>
    %c0_12 = arith.constant 0 : index
    %c0_13 = arith.constant 0 : index
    %11 = vector.load %arg6[%c0_12, %c0_13] : memref<72x128xf32, #tpu.memory_space<vmem>>, vector<72x128xf32>
    tpu.vector_store %arg6[%c0_12, %c0_13], %10 {strides = array<i32>} : memref<72x128xf32, #tpu.memory_space<vmem>>, vector<72x128xf32>,
    %c0_14 = arith.constant 0 : index
    %c1 = arith.constant 1 : index
    %c0_15 = arith.constant 0 : index
    %c0_16 = arith.constant 0 : index
    %12 = vector.load %arg2[%c0_14, %c1, %c0_15, %c0_16] : memref<1x4x90x4xf32, #tpu.memory_space<vmem>>, vector<1x1x72x4xf32>
    %13 = vector.shape_cast %12 : vector<1x1x72x4xf32> to vector<72x4xf32>
    %c0_17 = arith.constant 0 : index
    %c0_18 = arith.constant 0 : index
    %14 = vector.load %arg6[%c0_17, %c0_18] : memref<72x128xf32, #tpu.memory_space<vmem>>, vector<72x128xf32>
    %c1_19 = arith.constant 1 : index
    %c0_20 = arith.constant 0 : index
    %c0_21 = arith.constant 0 : index
    %15 = vector.load %arg3[%c1_19, %c0_20, %c0_21] : memref<9x4x128xf32, #tpu.memory_space<vmem>>, vector<1x4x128xf32>
    %16 = vector.shape_cast %15 : vector<1x4x128xf32> to vector<4x128xf32>
    %cst_22 = arith.constant dense<0.000000e+00> : vector<72x128xf32>
    %17 = tpu.matmul %13, %16, %cst_22 {dimension_numbers = #tpu.dot_dimension_numbers<[1], [0], [0], [1], [0, 0, 1, 1], [], []>} : vector<72x4xf32>, vector<4x128xf32>, vector<72x128xf32> -> vector<72x128xf32>
    %18 = arith.addf %14, %17 : vector<72x128xf32>
    %c0_23 = arith.constant 0 : index
    %c0_24 = arith.constant 0 : index
    %19 = vector.load %arg6[%c0_23, %c0_24] : memref<72x128xf32, #tpu.memory_space<vmem>>, vector<72x128xf32>
    tpu.vector_store %arg6[%c0_23, %c0_24], %18 {strides = array<i32>} : memref<72x128xf32, #tpu.memory_space<vmem>>, vector<72x128xf32>,
    %c0_25 = arith.constant 0 : index
    %c0_26 = arith.constant 0 : index
    %c1_27 = arith.constant 1 : index
    %c0_28 = arith.constant 0 : index
    %20 = vector.load %arg2[%c0_25, %c0_26, %c1_27, %c0_28] : memref<1x4x90x4xf32, #tpu.memory_space<vmem>>, vector<1x1x72x4xf32>
    %21 = vector.shape_cast %20 : vector<1x1x72x4xf32> to vector<72x4xf32>
    %c0_29 = arith.constant 0 : index
    %c0_30 = arith.constant 0 : index
    %22 = vector.load %arg6[%c0_29, %c0_30] : memref<72x128xf32, #tpu.memory_space<vmem>>, vector<72x128xf32>
    %c2 = arith.constant 2 : index
    %c0_31 = arith.constant 0 : index
    %c0_32 = arith.constant 0 : index
    %23 = vector.load %arg3[%c2, %c0_31, %c0_32] : memref<9x4x128xf32, #tpu.memory_space<vmem>>, vector<1x4x128xf32>
    %24 = vector.shape_cast %23 : vector<1x4x128xf32> to vector<4x128xf32>
    %cst_33 = arith.constant dense<0.000000e+00> : vector<72x128xf32>
    %25 = tpu.matmul %21, %24, %cst_33 {dimension_numbers = #tpu.dot_dimension_numbers<[1], [0], [0], [1], [0, 0, 1, 1], [], []>} : vector<72x4xf32>, vector<4x128xf32>, vector<72x128xf32> -> vector<72x128xf32>
    %26 = arith.addf %22, %25 : vector<72x128xf32>
    %c0_34 = arith.constant 0 : index
    %c0_35 = arith.constant 0 : index
    %27 = vector.load %arg6[%c0_34, %c0_35] : memref<72x128xf32, #tpu.memory_space<vmem>>, vector<72x128xf32>
    tpu.vector_store %arg6[%c0_34, %c0_35], %26 {strides = array<i32>} : memref<72x128xf32, #tpu.memory_space<vmem>>, vector<72x128xf32>,
    %c0_36 = arith.constant 0 : index
    %c2_37 = arith.constant 2 : index
    %c0_38 = arith.constant 0 : index
    %c0_39 = arith.constant 0 : index
    %28 = vector.load %arg2[%c0_36, %c2_37, %c0_38, %c0_39] : memref<1x4x90x4xf32, #tpu.memory_space<vmem>>, vector<1x1x72x4xf32>
    %29 = vector.shape_cast %28 : vector<1x1x72x4xf32> to vector<72x4xf32>
    %c0_40 = arith.constant 0 : index
    %c0_41 = arith.constant 0 : index
    %30 = vector.load %arg6[%c0_40, %c0_41] : memref<72x128xf32, #tpu.memory_space<vmem>>, vector<72x128xf32>
    %c3 = arith.constant 3 : index
    %c0_42 = arith.constant 0 : index
    %c0_43 = arith.constant 0 : index
    %31 = vector.load %arg3[%c3, %c0_42, %c0_43] : memref<9x4x128xf32, #tpu.memory_space<vmem>>, vector<1x4x128xf32>
    %32 = vector.shape_cast %31 : vector<1x4x128xf32> to vector<4x128xf32>
    %cst_44 = arith.constant dense<0.000000e+00> : vector<72x128xf32>
    %33 = tpu.matmul %29, %32, %cst_44 {dimension_numbers = #tpu.dot_dimension_numbers<[1], [0], [0], [1], [0, 0, 1, 1], [], []>} : vector<72x4xf32>, vector<4x128xf32>, vector<72x128xf32> -> vector<72x128xf32>
    %34 = arith.addf %30, %33 : vector<72x128xf32>
    %c0_45 = arith.constant 0 : index
    %c0_46 = arith.constant 0 : index
    %35 = vector.load %arg6[%c0_45, %c0_46] : memref<72x128xf32, #tpu.memory_space<vmem>>, vector<72x128xf32>
    tpu.vector_store %arg6[%c0_45, %c0_46], %34 {strides = array<i32>} : memref<72x128xf32, #tpu.memory_space<vmem>>, vector<72x128xf32>,
    %c0_47 = arith.constant 0 : index
    %c3_48 = arith.constant 3 : index
    %c0_49 = arith.constant 0 : index
    %c0_50 = arith.constant 0 : index
    %36 = vector.load %arg2[%c0_47, %c3_48, %c0_49, %c0_50] : memref<1x4x90x4xf32, #tpu.memory_space<vmem>>, vector<1x1x72x4xf32>
    %37 = vector.shape_cast %36 : vector<1x1x72x4xf32> to vector<72x4xf32>
    %c0_51 = arith.constant 0 : index
    %c0_52 = arith.constant 0 : index
    %38 = vector.load %arg6[%c0_51, %c0_52] : memref<72x128xf32, #tpu.memory_space<vmem>>, vector<72x128xf32>
    %c4 = arith.constant 4 : index
    %c0_53 = arith.constant 0 : index
    %c0_54 = arith.constant 0 : index
    %39 = vector.load %arg3[%c4, %c0_53, %c0_54] : memref<9x4x128xf32, #tpu.memory_space<vmem>>, vector<1x4x128xf32>
    %40 = vector.shape_cast %39 : vector<1x4x128xf32> to vector<4x128xf32>
    %cst_55 = arith.constant dense<0.000000e+00> : vector<72x128xf32>
    %41 = tpu.matmul %37, %40, %cst_55 {dimension_numbers = #tpu.dot_dimension_numbers<[1], [0], [0], [1], [0, 0, 1, 1], [], []>} : vector<72x4xf32>, vector<4x128xf32>, vector<72x128xf32> -> vector<72x128xf32>
    %42 = arith.addf %38, %41 : vector<72x128xf32>
    %c0_56 = arith.constant 0 : index
    %c0_57 = arith.constant 0 : index
    %43 = vector.load %arg6[%c0_56, %c0_57] : memref<72x128xf32, #tpu.memory_space<vmem>>, vector<72x128xf32>
    tpu.vector_store %arg6[%c0_56, %c0_57], %42 {strides = array<i32>} : memref<72x128xf32, #tpu.memory_space<vmem>>, vector<72x128xf32>,
    %c0_58 = arith.constant 0 : index
    %c2_59 = arith.constant 2 : index
    %c1_60 = arith.constant 1 : index
    %c0_61 = arith.constant 0 : index
    %44 = vector.load %arg2[%c0_58, %c2_59, %c1_60, %c0_61] : memref<1x4x90x4xf32, #tpu.memory_space<vmem>>, vector<1x1x72x4xf32>
    %45 = vector.shape_cast %44 : vector<1x1x72x4xf32> to vector<72x4xf32>
    %c0_62 = arith.constant 0 : index
    %c0_63 = arith.constant 0 : index
    %46 = vector.load %arg6[%c0_62, %c0_63] : memref<72x128xf32, #tpu.memory_space<vmem>>, vector<72x128xf32>
    %c5 = arith.constant 5 : index
    %c0_64 = arith.constant 0 : index
    %c0_65 = arith.constant 0 : index
    %47 = vector.load %arg3[%c5, %c0_64, %c0_65] : memref<9x4x128xf32, #tpu.memory_space<vmem>>, vector<1x4x128xf32>
    %48 = vector.shape_cast %47 : vector<1x4x128xf32> to vector<4x128xf32>
    %cst_66 = arith.constant dense<0.000000e+00> : vector<72x128xf32>
    %49 = tpu.matmul %45, %48, %cst_66 {dimension_numbers = #tpu.dot_dimension_numbers<[1], [0], [0], [1], [0, 0, 1, 1], [], []>} : vector<72x4xf32>, vector<4x128xf32>, vector<72x128xf32> -> vector<72x128xf32>
    %50 = arith.addf %46, %49 : vector<72x128xf32>
    %c0_67 = arith.constant 0 : index
    %c0_68 = arith.constant 0 : index
    %51 = vector.load %arg6[%c0_67, %c0_68] : memref<72x128xf32, #tpu.memory_space<vmem>>, vector<72x128xf32>
    tpu.vector_store %arg6[%c0_67, %c0_68], %50 {strides = array<i32>} : memref<72x128xf32, #tpu.memory_space<vmem>>, vector<72x128xf32>,
    %c0_69 = arith.constant 0 : index
    %c0_70 = arith.constant 0 : index
    %c9 = arith.constant 9 : index
    %c0_71 = arith.constant 0 : index
    %52 = vector.load %arg2[%c0_69, %c0_70, %c9, %c0_71] : memref<1x4x90x4xf32, #tpu.memory_space<vmem>>, vector<1x1x72x4xf32>
    %53 = vector.shape_cast %52 : vector<1x1x72x4xf32> to vector<72x4xf32>
    %c0_72 = arith.constant 0 : index
    %c0_73 = arith.constant 0 : index
    %54 = vector.load %arg6[%c0_72, %c0_73] : memref<72x128xf32, #tpu.memory_space<vmem>>, vector<72x128xf32>
    %c6 = arith.constant 6 : index
    %c0_74 = arith.constant 0 : index
    %c0_75 = arith.constant 0 : index
    %55 = vector.load %arg3[%c6, %c0_74, %c0_75] : memref<9x4x128xf32, #tpu.memory_space<vmem>>, vector<1x4x128xf32>
    %56 = vector.shape_cast %55 : vector<1x4x128xf32> to vector<4x128xf32>
    %cst_76 = arith.constant dense<0.000000e+00> : vector<72x128xf32>
    %57 = tpu.matmul %53, %56, %cst_76 {dimension_numbers = #tpu.dot_dimension_numbers<[1], [0], [0], [1], [0, 0, 1, 1], [], []>} : vector<72x4xf32>, vector<4x128xf32>, vector<72x128xf32> -> vector<72x128xf32>
    %58 = arith.addf %54, %57 : vector<72x128xf32>
    %c0_77 = arith.constant 0 : index
    %c0_78 = arith.constant 0 : index
    %59 = vector.load %arg6[%c0_77, %c0_78] : memref<72x128xf32, #tpu.memory_space<vmem>>, vector<72x128xf32>
    tpu.vector_store %arg6[%c0_77, %c0_78], %58 {strides = array<i32>} : memref<72x128xf32, #tpu.memory_space<vmem>>, vector<72x128xf32>,
    %c0_79 = arith.constant 0 : index
    %c1_80 = arith.constant 1 : index
    %c9_81 = arith.constant 9 : index
    %c0_82 = arith.constant 0 : index
    %60 = vector.load %arg2[%c0_79, %c1_80, %c9_81, %c0_82] : memref<1x4x90x4xf32, #tpu.memory_space<vmem>>, vector<1x1x72x4xf32>
    %61 = vector.shape_cast %60 : vector<1x1x72x4xf32> to vector<72x4xf32>
    %c0_83 = arith.constant 0 : index
    %c0_84 = arith.constant 0 : index
    %62 = vector.load %arg6[%c0_83, %c0_84] : memref<72x128xf32, #tpu.memory_space<vmem>>, vector<72x128xf32>
    %c7 = arith.constant 7 : index
    %c0_85 = arith.constant 0 : index
    %c0_86 = arith.constant 0 : index
    %63 = vector.load %arg3[%c7, %c0_85, %c0_86] : memref<9x4x128xf32, #tpu.memory_space<vmem>>, vector<1x4x128xf32>
    %64 = vector.shape_cast %63 : vector<1x4x128xf32> to vector<4x128xf32>
    %cst_87 = arith.constant dense<0.000000e+00> : vector<72x128xf32>
    %65 = tpu.matmul %61, %64, %cst_87 {dimension_numbers = #tpu.dot_dimension_numbers<[1], [0], [0], [1], [0, 0, 1, 1], [], []>} : vector<72x4xf32>, vector<4x128xf32>, vector<72x128xf32> -> vector<72x128xf32>
    %66 = arith.addf %62, %65 : vector<72x128xf32>
    %c0_88 = arith.constant 0 : index
    %c0_89 = arith.constant 0 : index
    %67 = vector.load %arg6[%c0_88, %c0_89] : memref<72x128xf32, #tpu.memory_space<vmem>>, vector<72x128xf32>
    tpu.vector_store %arg6[%c0_88, %c0_89], %66 {strides = array<i32>} : memref<72x128xf32, #tpu.memory_space<vmem>>, vector<72x128xf32>,
    %c0_90 = arith.constant 0 : index
    %c0_91 = arith.constant 0 : index
    %c10 = arith.constant 10 : index
    %c0_92 = arith.constant 0 : index
    %68 = vector.load %arg2[%c0_90, %c0_91, %c10, %c0_92] : memref<1x4x90x4xf32, #tpu.memory_space<vmem>>, vector<1x1x72x4xf32>
    %69 = vector.shape_cast %68 : vector<1x1x72x4xf32> to vector<72x4xf32>
    %c0_93 = arith.constant 0 : index
    %c0_94 = arith.constant 0 : index
    %70 = vector.load %arg6[%c0_93, %c0_94] : memref<72x128xf32, #tpu.memory_space<vmem>>, vector<72x128xf32>
    %c8 = arith.constant 8 : index
    %c0_95 = arith.constant 0 : index
    %c0_96 = arith.constant 0 : index
    %71 = vector.load %arg3[%c8, %c0_95, %c0_96] : memref<9x4x128xf32, #tpu.memory_space<vmem>>, vector<1x4x128xf32>
    %72 = vector.shape_cast %71 : vector<1x4x128xf32> to vector<4x128xf32>
    %cst_97 = arith.constant dense<0.000000e+00> : vector<72x128xf32>
    %73 = tpu.matmul %69, %72, %cst_97 {dimension_numbers = #tpu.dot_dimension_numbers<[1], [0], [0], [1], [0, 0, 1, 1], [], []>} : vector<72x4xf32>, vector<4x128xf32>, vector<72x128xf32> -> vector<72x128xf32>
    %74 = arith.addf %70, %73 : vector<72x128xf32>
    %c0_98 = arith.constant 0 : index
    %c0_99 = arith.constant 0 : index
    %75 = vector.load %arg6[%c0_98, %c0_99] : memref<72x128xf32, #tpu.memory_space<vmem>>, vector<72x128xf32>
    tpu.vector_store %arg6[%c0_98, %c0_99], %74 {strides = array<i32>} : memref<72x128xf32, #tpu.memory_space<vmem>>, vector<72x128xf32>,
    %c0_100 = arith.constant 0 : index
    %c0_101 = arith.constant 0 : index
    %76 = vector.load %arg6[%c0_100, %c0_101] : memref<72x128xf32, #tpu.memory_space<vmem>>, vector<72x128xf32>
    %c0_102 = arith.constant 0 : index
    %c0_103 = arith.constant 0 : index
    %c0_104 = arith.constant 0 : index
    %77 = vector.load %arg5[%c0_102, %c0_103, %c0_104] : memref<1x72x128xf32, #tpu.memory_space<vmem>>, vector<1x72x128xf32>
    %78 = vector.shape_cast %77 : vector<1x72x128xf32> to vector<72x128xf32>
    %79 = vector.shape_cast %76 : vector<72x128xf32> to vector<1x72x128xf32>
    tpu.vector_store %arg5[%c0_102, %c0_103, %c0_104], %79 {strides = array<i32>} : memref<1x72x128xf32, #tpu.memory_space<vmem>>, vector<1x72x128xf32>,
    return
  }
  func.func @transform_0(%arg0: i32, %arg1: i32) -> (i32, i32, i32, i32) {
    %c0_i32 = arith.constant 0 : i32
    %c0_i32_0 = arith.constant 0 : i32
    %c0_i32_1 = arith.constant 0 : i32
    %c0_i32_2 = arith.constant 0 : i32
    return %arg0, %c0_i32, %c0_i32_0, %c0_i32_1 : i32, i32, i32, i32
  }
  func.func @transform_1(%arg0: i32, %arg1: i32) -> (i32, i32, i32) {
    %c0_i32 = arith.constant 0 : i32
    %c0_i32_0 = arith.constant 0 : i32
    %c0_i32_1 = arith.constant 0 : i32
    return %c0_i32, %c0_i32_0, %arg1 : i32, i32, i32
  }
  func.func @transform_2(%arg0: i32, %arg1: i32) -> (i32, i32) {
    %c0_i32 = arith.constant 0 : i32
    %c0_i32_0 = arith.constant 0 : i32
    return %c0_i32, %arg1 : i32, i32
  }
  func.func @transform_3(%arg0: i32, %arg1: i32) -> (i32, i32, i32) {
    %c0_i32 = arith.constant 0 : i32
    %c0_i32_0 = arith.constant 0 : i32
    return %arg0, %c0_i32, %arg1 : i32, i32, i32
  }
}

</mosaic_0001>

<llo_original>
// kernel: downsample_conv2d.1
$region0: #{downsample_conv2d.1}
  #allocation0 [shape = 'u32[]', space=smem, size = 0x4, offset = 0x4, fixed_abs, tag = 'smem constant byte address 0x4 - core index']
  #allocation1 [shape = 'u32[72,128]{1,0:T(1,128)}', space=vmem, size = 0x9000, scoped, tag = 'internal scratch']
  #allocation2 [shape = 'f32[72,128]{1,0:T(8,128)}', space=vmem, size = 0x9000, scoped, tag = 'scratch operand']
  %s0 = inlined_call_operand.vmem [shape: f32[2,4,90,4], index: 0, kind: input, shape index: {}]
  %s1 = inlined_call_operand.vmem [shape: f32[9,4,128], index: 1, kind: input, shape index: {}]
  %s2 = inlined_call_operand.vmem [shape: f32[1,128], index: 2, kind: input, shape index: {}]
  %s3 = inlined_call_operand.vmem [shape: f32[2,72,128], index: 3, kind: output, shape index: {}]
  %s4 = sld [smem:[#allocation0]]
  $region45: #{downsample_conv2d.1} parent=0
    _
  %s6 = ssub.s32 1, %s4
  %s7 = scalar_select 0, %s6, %s4
  loop: start=0, step=1, limit=4
  $region2: #{downsample_conv2d.1} parent=0 // loop_pre_header
    _
  $region3: #{downsample_conv2d.1} parent=0 // loop_header
    %s9 = sphi 0, %s13
    %p10 = scmp.ge.s32.totalorder %s9, 4
    %s16 = sphi 0, %s28
    %s17 = sphi 0, %s24
    %s18 = sphi 0, %s16
    %s19 = sphi 0, %s17
    %s20 = sphi 0, %s18
    %s21 = sphi 0, %s19
    %s31 = sphi 0, %s33
    %s34 = sphi 0, %s31
    %s35 = sphi 0, %s34
    %s51 = sphi 0, %s35
    %s57 = sphi 0, %s59
    %s60 = sphi 0, %s57
    %s61 = sphi 0, %s60
    %s77 = sphi 0, %s61
    %s83 = sphi 0, %s85
    %s86 = sphi 0, %s83
    %s87 = sphi 0, %s86
    %s103 = sphi 0, %s87
    %s111 = sphi 0, %s113
    %s114 = sphi 0, %s111
    %s115 = sphi 0, %s114
    %s131 = sphi 0, %s115
  $region4: #{downsample_conv2d.1} parent=0 // loop_header_branch
    %12 = sbr.rel (%p10) target = $region8
  $region5: #{downsample_conv2d.1} parent=0 // loop_body
    %s14 = ssub.s32 %s9, 1
    %s15 = ssub.s32 %s9, 2
    %s22 = sadd.s32 1, %s17
    %p23 = scmp.ge.s32.totalorder %s22, 1
    %s24 = scalar_select %p23, 0, %s22
    %s25 = sadd.s32 1, %s16
    %s26 = scalar_select %p23, %s25, %s16
    %p27 = scmp.ge.s32.totalorder %s26, 2
    %s28 = scalar_select %p27, 0, %s26
    %s29 = ssub.s32 %s16, %s28
    %p30 = scmp.eq.s32.totalorder %s29, 0
    %s32 = sadd.s32 %s31, 1
    %s33 = scalar_select %p30, %s31, %s32
    %p36 = pneg %p30
    %p37 = scmp.eq.s32.totalorder %s9, 1
    %p38 = por %p36, %p37
    %p39 = scmp.ne.s32.totalorder %s31, %s34
    %p40 = scmp.eq.s32.totalorder %s9, 0
    %p41 = por %p39, %p40
    %p42 = scmp.ne.s32.totalorder %s31, %s34
    %p43 = scmp.eq.s32.totalorder %s14, 1
    %p44 = por %p42, %p43
    %p45 = scmp.ne.s32.totalorder %s34, %s35
    %p46 = scmp.eq.s32.totalorder %s14, 0
    %p47 = por %p45, %p46
    %p48 = scmp.ne.s32.totalorder %s34, %s35
    %p49 = scmp.eq.s32.totalorder %s15, 1
    %p50 = por %p48, %p49
    %p52 = scmp.ne.s32.totalorder %s35, %s51
    %p53 = scmp.eq.s32.totalorder %s15, 0
    %p54 = por %p52, %p53
    %s55 = ssub.s32 %s17, %s24
    %p56 = scmp.eq.s32.totalorder %s55, 0
    %s58 = sadd.s32 %s57, 1
    %s59 = scalar_select %p56, %s57, %s58
    %p62 = pneg %p56
    %p63 = scmp.eq.s32.totalorder %s9, 1
    %p64 = por %p62, %p63
    %p65 = scmp.ne.s32.totalorder %s57, %s60
    %p66 = scmp.eq.s32.totalorder %s9, 0
    %p67 = por %p65, %p66
    %p68 = scmp.ne.s32.totalorder %s57, %s60
    %p69 = scmp.eq.s32.totalorder %s14, 1
    %p70 = por %p68, %p69
    %p71 = scmp.ne.s32.totalorder %s60, %s61
    %p72 = scmp.eq.s32.totalorder %s14, 0
    %p73 = por %p71, %p72
    %p74 = scmp.ne.s32.totalorder %s60, %s61
    %p75 = scmp.eq.s32.totalorder %s15, 1
    %p76 = por %p74, %p75
    %p78 = scmp.ne.s32.totalorder %s61, %s77
    %p79 = scmp.eq.s32.totalorder %s15, 0
    %p80 = por %p78, %p79
    %s81 = ssub.s32 %s17, %s24
    %p82 = scmp.eq.s32.totalorder %s81, 0
    %s84 = sadd.s32 %s83, 1
    %s85 = scalar_select %p82, %s83, %s84
    %p88 = pneg %p82
    %p89 = scmp.eq.s32.totalorder %s9, 1
    %p90 = por %p88, %p89
    %p91 = scmp.ne.s32.totalorder %s83, %s86
    %p92 = scmp.eq.s32.totalorder %s9, 0
    %p93 = por %p91, %p92
    %p94 = scmp.ne.s32.totalorder %s83, %s86
    %p95 = scmp.eq.s32.totalorder %s14, 1
    %p96 = por %p94, %p95
    %p97 = scmp.ne.s32.totalorder %s86, %s87
    %p98 = scmp.eq.s32.totalorder %s14, 0
    %p99 = por %p97, %p98
    %p100 = scmp.ne.s32.totalorder %s86, %s87
    %p101 = scmp.eq.s32.totalorder %s15, 1
    %p102 = por %p100, %p101
    %p104 = scmp.ne.s32.totalorder %s87, %s103
    %p105 = scmp.eq.s32.totalorder %s15, 0
    %p106 = por %p104, %p105
    %s107 = ssub.s32 %s16, %s28
    %s108 = ssub.s32 %s17, %s24
    %s109 = sor.u32 %s107, %s108
    %p110 = scmp.eq.s32.totalorder %s109, 0
    %s112 = sadd.s32 %s111, 1
    %s113 = scalar_select %p110, %s111, %s112
    %p116 = pneg %p110
    %p117 = scmp.eq.s32.totalorder %s9, 1
    %p118 = por %p116, %p117
    %p119 = scmp.ne.s32.totalorder %s111, %s114
    %p120 = scmp.eq.s32.totalorder %s9, 0
    %p121 = por %p119, %p120
    %p122 = scmp.ne.s32.totalorder %s111, %s114
    %p123 = scmp.eq.s32.totalorder %s14, 1
    %p124 = por %p122, %p123
    %p125 = scmp.ne.s32.totalorder %s114, %s115
    %p126 = scmp.eq.s32.totalorder %s14, 0
    %p127 = por %p125, %p126
    %p128 = scmp.ne.s32.totalorder %s114, %s115
    %p129 = scmp.eq.s32.totalorder %s15, 1
    %p130 = por %p128, %p129
    %p132 = scmp.ne.s32.totalorder %s115, %s131
    %p133 = scmp.eq.s32.totalorder %s15, 0
    %p134 = por %p132, %p133
    %p135 = scmp.le.s32.totalorder 1, %s9
    %p136 = scmp.lt.s32.totalorder %s9, 3
    %p137 = pnand %p135, %p136
    %p138 = pneg %p137
    // Predicated region
    $region9: #{downsample_conv2d.1} parent=5 // pred_check
      _
    $region10: #{downsample_conv2d.1} parent=5 // pred_check_branch
      %140 = sbr.rel (%p137) target = $region12
    $region11: #{downsample_conv2d.1} parent=5 // pred_region
      %s141 = ssub.s32 %s9, 1
      // Predicated region
      $region13: #{downsample_conv2d.1} parent=11 // pred_check
        %p142 = pneg %p73
      $region14: #{downsample_conv2d.1} parent=11 // pred_check_branch
        %144 = sbr.rel (%p142) target = $region16
      $region15: #{downsample_conv2d.1} parent=11 // pred_region
        %p145 = scmp.lt.s32.totalorder %s19, 0
        %s146 = scalar_select %p145, %s19, 0
        %s147 = smul.addr %s146, 4
        %s148 = scalar_lea.vmem %s1, %s147
      $region16: #{downsample_conv2d.1} parent=11 // pred_fallthru
        _
      // Predicated region
      $region17: #{downsample_conv2d.1} parent=11 // pred_check
        %p149 = pneg %p99
      $region18: #{downsample_conv2d.1} parent=11 // pred_check_branch
        %151 = sbr.rel (%p149) target = $region20
      $region19: #{downsample_conv2d.1} parent=11 // pred_region
        %p152 = scmp.lt.s32.totalorder %s19, 0
        %s153 = scalar_select %p152, %s19, 0
        %s154 = scalar_lea.vmem %s2, %s153
      $region20: #{downsample_conv2d.1} parent=11 // pred_fallthru
        _
    $region12: #{downsample_conv2d.1} parent=5 // pred_fallthru
      _
    %p155 = scmp.lt.s32.totalorder %s9, 2
    // Predicated region
    $region21: #{downsample_conv2d.1} parent=5 // pred_check
      %p156 = pneg %p155
    $region22: #{downsample_conv2d.1} parent=5 // pred_check_branch
      %158 = sbr.rel (%p156) target = $region24
    $region23: #{downsample_conv2d.1} parent=5 // pred_region
      // Predicated region
      $region25: #{downsample_conv2d.1} parent=23 // pred_check
        %p159 = pneg %p41
      $region26: #{downsample_conv2d.1} parent=23 // pred_check_branch
        %161 = sbr.rel (%p159) target = $region28
      $region27: #{downsample_conv2d.1} parent=23 // pred_region
        %p162 = scmp.lt.s32.totalorder %s16, 1
        %s163 = scalar_select %p162, %s16, 1
        %s164 = smul.addr %s163, 48
        %s165 = smul.addr %s164, 8
        %s166 = scalar_lea.vmem %s0, %s165
      $region28: #{downsample_conv2d.1} parent=23 // pred_fallthru
        _
    $region24: #{downsample_conv2d.1} parent=5 // pred_fallthru
      _
    %p167 = scmp.le.s32.totalorder 1, %s9
    %p168 = scmp.lt.s32.totalorder %s9, 3
    %p169 = pnand %p167, %p168
    %p170 = pneg %p169
    // Predicated region
    $region29: #{downsample_conv2d.1} parent=5 // pred_check
      _
    $region30: #{downsample_conv2d.1} parent=5 // pred_check_branch
      %172 = sbr.rel (%p169) target = $region32
    $region31: #{downsample_conv2d.1} parent=5 // pred_region
      %s173 = ssub.s32 %s9, 1
      %p174 = scmp.lt.s32.totalorder %s18, 1
      %s175 = scalar_select %p174, %s18, 1
      %s176 = smul.addr %s175, 48
      %s177 = smul.addr %s176, 8
      %s178 = scalar_lea.vmem %s0, %s177
      %p179 = pneg %p47
      %p180 = pneg %p44
      %p181 = scmp.lt.s32.totalorder %s19, 0
      %s182 = scalar_select %p181, %s19, 0
      %s183 = smul.addr %s182, 4
      %s184 = scalar_lea.vmem %s1, %s183
      %p185 = pneg %p73
      %p186 = pneg %p70
      %p187 = scmp.lt.s32.totalorder %s19, 0
      %s188 = scalar_select %p187, %s19, 0
      %s189 = scalar_lea.vmem %s2, %s188
      %p190 = pneg %p99
      %p191 = pneg %p96
      %p192 = pneg %p127
      %p193 = pneg %p124
      %p194 = scmp.lt.s32.totalorder %s18, 1
      %s195 = scalar_select %p194, %s18, 1
      %p196 = scmp.lt.s32.totalorder %s19, 0
      %s197 = scalar_select %p196, %s19, 0
      %s198 = smul.addr %s195, 9
      %s199 = sadd.s32 %s197, %s198
      %s200 = smul.addr %s199, 8
      %s201 = scalar_lea.vmem %s3, %s200
      %p202 = scmp.lt.s32.totalorder %s18, 1
      %s203 = scalar_select %p202, %s18, 1
      %s204 = smul.addr %s203, 48
      %s205 = smul.addr %s204, 8
      %s206 = scalar_lea.vmem %s0, %s205
      %p207 = scmp.lt.s32.totalorder %s19, 0
      %s208 = scalar_select %p207, %s19, 0
      %s209 = smul.addr %s208, 4
      %s210 = scalar_lea.vmem %s1, %s209
      %p211 = scmp.lt.s32.totalorder %s19, 0
      %s212 = scalar_select %p211, %s19, 0
      %s213 = scalar_lea.vmem %s2, %s212
      %p214 = scmp.lt.s32.totalorder %s18, 1
      %s215 = scalar_select %p214, %s18, 1
      %p216 = scmp.lt.s32.totalorder %s19, 0
      %s217 = scalar_select %p216, %s19, 0
      %s218 = smul.addr %s215, 9
      %s219 = sadd.s32 %s217, %s218
      %s220 = smul.addr %s219, 8
      %s221 = scalar_lea.vmem %s3, %s220
      %v222 = vld [vmem:[%s213] sm:$0x1]
      %v224 = vperm.slane %v222, 0
      %226 = vst [vmem:[#allocation2] sm:$0xff] %v224
      %227 = vst [vmem:[#allocation2 + $0x8] sm:$0xff] %v224
      %228 = vst [vmem:[#allocation2 + $0x10] sm:$0xff] %v224
      %229 = vst [vmem:[#allocation2 + $0x18] sm:$0xff] %v224
      %230 = vst [vmem:[#allocation2 + $0x20] sm:$0xff] %v224
      %231 = vst [vmem:[#allocation2 + $0x28] sm:$0xff] %v224
      %232 = vst [vmem:[#allocation2 + $0x30] sm:$0xff] %v224
      %233 = vst [vmem:[#allocation2 + $0x38] sm:$0xff] %v224
      %234 = vst [vmem:[#allocation2 + $0x40] sm:$0xff] %v224
      %v235 = vld [vmem:[%s206] sm:$0xff]
      %v236 = vld [vmem:[%s206 + $0x8] sm:$0xff]
      %v237 = vld [vmem:[%s206 + $0x10] sm:$0xff]
      %v238 = vld [vmem:[%s206 + $0x18] sm:$0xff]
      %v239 = vld [vmem:[%s206 + $0x20] sm:$0xff]
      %v240 = vld [vmem:[%s206 + $0x28] sm:$0xff]
      %v241 = vld [vmem:[%s206 + $0x30] sm:$0xff]
      %v242 = vld [vmem:[%s206 + $0x38] sm:$0xff]
      %v243 = vld [vmem:[%s206 + $0x40] sm:$0xff]
      %v244 = vld [vmem:[#allocation2] sm:$0xff]
      %v245 = vld [vmem:[#allocation2 + $0x8] sm:$0xff]
      %v246 = vld [vmem:[#allocation2 + $0x10] sm:$0xff]
      %v247 = vld [vmem:[#allocation2 + $0x18] sm:$0xff]
      %v248 = vld [vmem:[#allocation2 + $0x20] sm:$0xff]
      %v249 = vld [vmem:[#allocation2 + $0x28] sm:$0xff]
      %v250 = vld [vmem:[#allocation2 + $0x30] sm:$0xff]
      %v251 = vld [vmem:[#allocation2 + $0x38] sm:$0xff]
      %v252 = vld [vmem:[#allocation2 + $0x40] sm:$0xff]
      %v253 = vld [vmem:[%s210] sm:$0xf]
      %vm254 = vcmask 31744
      %v256 = vsel %vm254, %v235, 0
      %v259 = vsel %vm254, %v236, 0
      %v262 = vsel %vm254, %v237, 0
      %v265 = vsel %vm254, %v238, 0
      %v268 = vsel %vm254, %v239, 0
      %v271 = vsel %vm254, %v240, 0
      %v274 = vsel %vm254, %v241, 0
      %v277 = vsel %vm254, %v242, 0
      %v280 = vsel %vm254, %v243, 0
      %vm282 = vcmask 1043456
      %v284 = vsel %vm282, %v253, 0
      %286 = vmatpush.msra.mxu0 0.0
      %287 = vmatpush.msra.mxu0 0.0
      %288 = vmatpush.msra.mxu0 0.0
      %289 = vmatpush.msra.mxu0 0.0
      %290 = vmatpush.msra.mxu0 0.0
      %291 = vmatpush.msra.mxu0 0.0
      %292 = vmatpush.msra.mxu0 0.0
      %293 = vmatpush.msra.mxu0 0.0
      %294 = vmatpush.msra.mxu0 0.0
      %295 = vmatpush.msra.mxu0 0.0
      %296 = vmatpush.msra.mxu0 0.0
      %297 = vmatpush.msra.mxu0 0.0
      %298 = vmatpush.msra.mxu0 0.0
      %299 = vmatpush.msra.mxu0 0.0
      %300 = vmatpush.msra.mxu0 0.0
      %301 = vmatpush.msra.mxu0 %v284
      %302 = vmatmul.f32.gmra.mxu0 %v256
      %v303 = vpop.f32.mrf.mxu0
      %v304 = vadd.f32 0.0, %v303
      %305 = vmatmul.f32.gmra.mxu0 %v259
      %v306 = vpop.f32.mrf.mxu0
      %v307 = vadd.f32 0.0, %v306
      %308 = vmatmul.f32.gmra.mxu0 %v262
      %v309 = vpop.f32.mrf.mxu0
      %v310 = vadd.f32 0.0, %v309
      %311 = vmatmul.f32.gmra.mxu0 %v265
      %v312 = vpop.f32.mrf.mxu0
      %v313 = vadd.f32 0.0, %v312
      %314 = vmatmul.f32.gmra.mxu0 %v268
      %v315 = vpop.f32.mrf.mxu0
      %v316 = vadd.f32 0.0, %v315
      %317 = vmatmul.f32.gmra.mxu0 %v271
      %v318 = vpop.f32.mrf.mxu0
      %v319 = vadd.f32 0.0, %v318
      %320 = vmatmul.f32.gmra.mxu0 %v274
      %v321 = vpop.f32.mrf.mxu0
      %v322 = vadd.f32 0.0, %v321
      %323 = vmatmul.f32.gmra.mxu0 %v277
      %v324 = vpop.f32.mrf.mxu0
      %v325 = vadd.f32 0.0, %v324
      %326 = vmatmul.f32.gmra.mxu0 %v280
      %v327 = vpop.f32.mrf.mxu0
      %v328 = vadd.f32 0.0, %v327
      %329 = vdwg.mxu0
      %v330 = vadd.f32 %v244, %v304
      %v331 = vadd.f32 %v245, %v307
      %v332 = vadd.f32 %v246, %v310
      %v333 = vadd.f32 %v247, %v313
      %v334 = vadd.f32 %v248, %v316
      %v335 = vadd.f32 %v249, %v319
      %v336 = vadd.f32 %v250, %v322
      %v337 = vadd.f32 %v251, %v325
      %v338 = vadd.f32 %v252, %v328
      %339 = vst [vmem:[#allocation2] sm:$0xff] %v330
      %340 = vst [vmem:[#allocation2 + $0x8] sm:$0xff] %v331
      %341 = vst [vmem:[#allocation2 + $0x10] sm:$0xff] %v332
      %342 = vst [vmem:[#allocation2 + $0x18] sm:$0xff] %v333
      %343 = vst [vmem:[#allocation2 + $0x20] sm:$0xff] %v334
      %344 = vst [vmem:[#allocation2 + $0x28] sm:$0xff] %v335
      %345 = vst [vmem:[#allocation2 + $0x30] sm:$0xff] %v336
      %346 = vst [vmem:[#allocation2 + $0x38] sm:$0xff] %v337
      %347 = vst [vmem:[#allocation2 + $0x40] sm:$0xff] %v338
      %s348 = scalar_lea.vmem %s206, 96
      %v349 = vld [vmem:[%s348] sm:$0xff]
      %v350 = vld [vmem:[%s348 + $0x8] sm:$0xff]
      %v351 = vld [vmem:[%s348 + $0x10] sm:$0xff]
      %v352 = vld [vmem:[%s348 + $0x18] sm:$0xff]
      %v353 = vld [vmem:[%s348 + $0x20] sm:$0xff]
      %v354 = vld [vmem:[%s348 + $0x28] sm:$0xff]
      %v355 = vld [vmem:[%s348 + $0x30] sm:$0xff]
      %v356 = vld [vmem:[%s348 + $0x38] sm:$0xff]
      %v357 = vld [vmem:[%s348 + $0x40] sm:$0xff]
      %v358 = vld [vmem:[#allocation2] sm:$0xff]
      %v359 = vld [vmem:[#allocation2 + $0x8] sm:$0xff]
      %v360 = vld [vmem:[#allocation2 + $0x10] sm:$0xff]
      %v361 = vld [vmem:[#allocation2 + $0x18] sm:$0xff]
      %v362 = vld [vmem:[#allocation2 + $0x20] sm:$0xff]
      %v363 = vld [vmem:[#allocation2 + $0x28] sm:$0xff]
      %v364 = vld [vmem:[#allocation2 + $0x30] sm:$0xff]
      %v365 = vld [vmem:[#allocation2 + $0x38] sm:$0xff]
      %v366 = vld [vmem:[#allocation2 + $0x40] sm:$0xff]
      %s367 = scalar_lea.vmem %s210, 4
      %v368 = vld [vmem:[%s367] sm:$0xf]
      %v370 = vsel %vm254, %v349, 0
      %v373 = vsel %vm254, %v350, 0
      %v376 = vsel %vm254, %v351, 0
      %v379 = vsel %vm254, %v352, 0
      %v382 = vsel %vm254, %v353, 0
      %v385 = vsel %vm254, %v354, 0
      %v388 = vsel %vm254, %v355, 0
      %v391 = vsel %vm254, %v356, 0
      %v394 = vsel %vm254, %v357, 0
      %v397 = vsel %vm282, %v368, 0
      %399 = vmatpush.msra.mxu0 0.0
      %400 = vmatpush.msra.mxu0 0.0
      %401 = vmatpush.msra.mxu0 0.0
      %402 = vmatpush.msra.mxu0 0.0
      %403 = vmatpush.msra.mxu0 0.0
      %404 = vmatpush.msra.mxu0 0.0
      %405 = vmatpush.msra.mxu0 0.0
      %406 = vmatpush.msra.mxu0 0.0
      %407 = vmatpush.msra.mxu0 0.0
      %408 = vmatpush.msra.mxu0 0.0
      %409 = vmatpush.msra.mxu0 0.0
      %410 = vmatpush.msra.mxu0 0.0
      %411 = vmatpush.msra.mxu0 0.0
      %412 = vmatpush.msra.mxu0 0.0
      %413 = vmatpush.msra.mxu0 0.0
      %414 = vmatpush.msra.mxu0 %v397
      %415 = vmatmul.f32.gmra.mxu0 %v370
      %v416 = vpop.f32.mrf.mxu0
      %v417 = vadd.f32 0.0, %v416
      %418 = vmatmul.f32.gmra.mxu0 %v373
      %v419 = vpop.f32.mrf.mxu0
      %v420 = vadd.f32 0.0, %v419
      %421 = vmatmul.f32.gmra.mxu0 %v376
      %v422 = vpop.f32.mrf.mxu0
      %v423 = vadd.f32 0.0, %v422
      %424 = vmatmul.f32.gmra.mxu0 %v379
      %v425 = vpop.f32.mrf.mxu0
      %v426 = vadd.f32 0.0, %v425
      %427 = vmatmul.f32.gmra.mxu0 %v382
      %v428 = vpop.f32.mrf.mxu0
      %v429 = vadd.f32 0.0, %v428
      %430 = vmatmul.f32.gmra.mxu0 %v385
      %v431 = vpop.f32.mrf.mxu0
      %v432 = vadd.f32 0.0, %v431
      %433 = vmatmul.f32.gmra.mxu0 %v388
      %v434 = vpop.f32.mrf.mxu0
      %v435 = vadd.f32 0.0, %v434
      %436 = vmatmul.f32.gmra.mxu0 %v391
      %v437 = vpop.f32.mrf.mxu0
      %v438 = vadd.f32 0.0, %v437
      %439 = vmatmul.f32.gmra.mxu0 %v394
      %v440 = vpop.f32.mrf.mxu0
      %v441 = vadd.f32 0.0, %v440
      %442 = vdwg.mxu0
      %v443 = vadd.f32 %v358, %v417
      %v444 = vadd.f32 %v359, %v420
      %v445 = vadd.f32 %v360, %v423
      %v446 = vadd.f32 %v361, %v426
      %v447 = vadd.f32 %v362, %v429
      %v448 = vadd.f32 %v363, %v432
      %v449 = vadd.f32 %v364, %v435
      %v450 = vadd.f32 %v365, %v438
      %v451 = vadd.f32 %v366, %v441
      %452 = vst [vmem:[#allocation2] sm:$0xff] %v443
      %453 = vst [vmem:[#allocation2 + $0x8] sm:$0xff] %v444
      %454 = vst [vmem:[#allocation2 + $0x10] sm:$0xff] %v445
      %455 = vst [vmem:[#allocation2 + $0x18] sm:$0xff] %v446
      %456 = vst [vmem:[#allocation2 + $0x20] sm:$0xff] %v447
      %457 = vst [vmem:[#allocation2 + $0x28] sm:$0xff] %v448
      %458 = vst [vmem:[#allocation2 + $0x30] sm:$0xff] %v449
      %459 = vst [vmem:[#allocation2 + $0x38] sm:$0xff] %v450
      %460 = vst [vmem:[#allocation2 + $0x40] sm:$0xff] %v451
      %v461 = vld [vmem:[%s206 + $0x1] sm:$0xff]
      %v462 = vld [vmem:[%s206 + $0x9] sm:$0xff]
      %v463 = vld [vmem:[%s206 + $0x11] sm:$0xff]
      %v464 = vld [vmem:[%s206 + $0x19] sm:$0xff]
      %v465 = vld [vmem:[%s206 + $0x21] sm:$0xff]
      %v466 = vld [vmem:[%s206 + $0x29] sm:$0xff]
      %v467 = vld [vmem:[%s206 + $0x31] sm:$0xff]
      %v468 = vld [vmem:[%s206 + $0x39] sm:$0xff]
      %v469 = vld [vmem:[%s206 + $0x41] sm:$0xff]
      %v470 = vld [vmem:[#allocation2] sm:$0xff]
      %v471 = vld [vmem:[#allocation2 + $0x8] sm:$0xff]
      %v472 = vld [vmem:[#allocation2 + $0x10] sm:$0xff]
      %v473 = vld [vmem:[#allocation2 + $0x18] sm:$0xff]
      %v474 = vld [vmem:[#allocation2 + $0x20] sm:$0xff]
      %v475 = vld [vmem:[#allocation2 + $0x28] sm:$0xff]
      %v476 = vld [vmem:[#allocation2 + $0x30] sm:$0xff]
      %v477 = vld [vmem:[#allocation2 + $0x38] sm:$0xff]
      %v478 = vld [vmem:[#allocation2 + $0x40] sm:$0xff]
      %s479 = scalar_lea.vmem %s210, 8
      %v480 = vld [vmem:[%s479] sm:$0xf]
      %v482 = vsel %vm254, %v461, 0
      %v485 = vsel %vm254, %v462, 0
      %v488 = vsel %vm254, %v463, 0
      %v491 = vsel %vm254, %v464, 0
      %v494 = vsel %vm254, %v465, 0
      %v497 = vsel %vm254, %v466, 0
      %v500 = vsel %vm254, %v467, 0
      %v503 = vsel %vm254, %v468, 0
      %v506 = vsel %vm254, %v469, 0
      %v509 = vsel %vm282, %v480, 0
      %511 = vmatpush.msra.mxu0 0.0
      %512 = vmatpush.msra.mxu0 0.0
      %513 = vmatpush.msra.mxu0 0.0
      %514 = vmatpush.msra.mxu0 0.0
      %515 = vmatpush.msra.mxu0 0.0
      %516 = vmatpush.msra.mxu0 0.0
      %517 = vmatpush.msra.mxu0 0.0
      %518 = vmatpush.msra.mxu0 0.0
      %519 = vmatpush.msra.mxu0 0.0
      %520 = vmatpush.msra.mxu0 0.0
      %521 = vmatpush.msra.mxu0 0.0
      %522 = vmatpush.msra.mxu0 0.0
      %523 = vmatpush.msra.mxu0 0.0
      %524 = vmatpush.msra.mxu0 0.0
      %525 = vmatpush.msra.mxu0 0.0
      %526 = vmatpush.msra.mxu0 %v509
      %527 = vmatmul.f32.gmra.mxu0 %v482
      %v528 = vpop.f32.mrf.mxu0
      %v529 = vadd.f32 0.0, %v528
      %530 = vmatmul.f32.gmra.mxu0 %v485
      %v531 = vpop.f32.mrf.mxu0
      %v532 = vadd.f32 0.0, %v531
      %533 = vmatmul.f32.gmra.mxu0 %v488
      %v534 = vpop.f32.mrf.mxu0
      %v535 = vadd.f32 0.0, %v534
      %536 = vmatmul.f32.gmra.mxu0 %v491
      %v537 = vpop.f32.mrf.mxu0
      %v538 = vadd.f32 0.0, %v537
      %539 = vmatmul.f32.gmra.mxu0 %v494
      %v540 = vpop.f32.mrf.mxu0
      %v541 = vadd.f32 0.0, %v540
      %542 = vmatmul.f32.gmra.mxu0 %v497
      %v543 = vpop.f32.mrf.mxu0
      %v544 = vadd.f32 0.0, %v543
      %545 = vmatmul.f32.gmra.mxu0 %v500
      %v546 = vpop.f32.mrf.mxu0
      %v547 = vadd.f32 0.0, %v546
      %548 = vmatmul.f32.gmra.mxu0 %v503
      %v549 = vpop.f32.mrf.mxu0
      %v550 = vadd.f32 0.0, %v549
      %551 = vmatmul.f32.gmra.mxu0 %v506
      %v552 = vpop.f32.mrf.mxu0
      %v553 = vadd.f32 0.0, %v552
      %554 = vdwg.mxu0
      %v555 = vadd.f32 %v470, %v529
      %v556 = vadd.f32 %v471, %v532
      %v557 = vadd.f32 %v472, %v535
      %v558 = vadd.f32 %v473, %v538
      %v559 = vadd.f32 %v474, %v541
      %v560 = vadd.f32 %v475, %v544
      %v561 = vadd.f32 %v476, %v547
      %v562 = vadd.f32 %v477, %v550
      %v563 = vadd.f32 %v478, %v553
      %564 = vst [vmem:[#allocation2] sm:$0xff] %v555
      %565 = vst [vmem:[#allocation2 + $0x8] sm:$0xff] %v556
      %566 = vst [vmem:[#allocation2 + $0x10] sm:$0xff] %v557
      %567 = vst [vmem:[#allocation2 + $0x18] sm:$0xff] %v558
      %568 = vst [vmem:[#allocation2 + $0x20] sm:$0xff] %v559
      %569 = vst [vmem:[#allocation2 + $0x28] sm:$0xff] %v560
      %570 = vst [vmem:[#allocation2 + $0x30] sm:$0xff] %v561
      %571 = vst [vmem:[#allocation2 + $0x38] sm:$0xff] %v562
      %572 = vst [vmem:[#allocation2 + $0x40] sm:$0xff] %v563
      %s573 = scalar_lea.vmem %s206, 192
      %v574 = vld [vmem:[%s573] sm:$0xff]
      %v575 = vld [vmem:[%s573 + $0x8] sm:$0xff]
      %v576 = vld [vmem:[%s573 + $0x10] sm:$0xff]
      %v577 = vld [vmem:[%s573 + $0x18] sm:$0xff]
      %v578 = vld [vmem:[%s573 + $0x20] sm:$0xff]
      %v579 = vld [vmem:[%s573 + $0x28] sm:$0xff]
      %v580 = vld [vmem:[%s573 + $0x30] sm:$0xff]
      %v581 = vld [vmem:[%s573 + $0x38] sm:$0xff]
      %v582 = vld [vmem:[%s573 + $0x40] sm:$0xff]
      %v583 = vld [vmem:[#allocation2] sm:$0xff]
      %v584 = vld [vmem:[#allocation2 + $0x8] sm:$0xff]
      %v585 = vld [vmem:[#allocation2 + $0x10] sm:$0xff]
      %v586 = vld [vmem:[#allocation2 + $0x18] sm:$0xff]
      %v587 = vld [vmem:[#allocation2 + $0x20] sm:$0xff]
      %v588 = vld [vmem:[#allocation2 + $0x28] sm:$0xff]
      %v589 = vld [vmem:[#allocation2 + $0x30] sm:$0xff]
      %v590 = vld [vmem:[#allocation2 + $0x38] sm:$0xff]
      %v591 = vld [vmem:[#allocation2 + $0x40] sm:$0xff]
      %s592 = scalar_lea.vmem %s210, 12
      %v593 = vld [vmem:[%s592] sm:$0xf]
      %v595 = vsel %vm254, %v574, 0
      %v598 = vsel %vm254, %v575, 0
      %v601 = vsel %vm254, %v576, 0
      %v604 = vsel %vm254, %v577, 0
      %v607 = vsel %vm254, %v578, 0
      %v610 = vsel %vm254, %v579, 0
      %v613 = vsel %vm254, %v580, 0
      %v616 = vsel %vm254, %v581, 0
      %v619 = vsel %vm254, %v582, 0
      %v622 = vsel %vm282, %v593, 0
      %624 = vmatpush.msra.mxu0 0.0
      %625 = vmatpush.msra.mxu0 0.0
      %626 = vmatpush.msra.mxu0 0.0
      %627 = vmatpush.msra.mxu0 0.0
      %628 = vmatpush.msra.mxu0 0.0
      %629 = vmatpush.msra.mxu0 0.0
      %630 = vmatpush.msra.mxu0 0.0
      %631 = vmatpush.msra.mxu0 0.0
      %632 = vmatpush.msra.mxu0 0.0
      %633 = vmatpush.msra.mxu0 0.0
      %634 = vmatpush.msra.mxu0 0.0
      %635 = vmatpush.msra.mxu0 0.0
      %636 = vmatpush.msra.mxu0 0.0
      %637 = vmatpush.msra.mxu0 0.0
      %638 = vmatpush.msra.mxu0 0.0
      %639 = vmatpush.msra.mxu0 %v622
      %640 = vmatmul.f32.gmra.mxu0 %v595
      %v641 = vpop.f32.mrf.mxu0
      %v642 = vadd.f32 0.0, %v641
      %643 = vmatmul.f32.gmra.mxu0 %v598
      %v644 = vpop.f32.mrf.mxu0
      %v645 = vadd.f32 0.0, %v644
      %646 = vmatmul.f32.gmra.mxu0 %v601
      %v647 = vpop.f32.mrf.mxu0
      %v648 = vadd.f32 0.0, %v647
      %649 = vmatmul.f32.gmra.mxu0 %v604
      %v650 = vpop.f32.mrf.mxu0
      %v651 = vadd.f32 0.0, %v650
      %652 = vmatmul.f32.gmra.mxu0 %v607
      %v653 = vpop.f32.mrf.mxu0
      %v654 = vadd.f32 0.0, %v653
      %655 = vmatmul.f32.gmra.mxu0 %v610
      %v656 = vpop.f32.mrf.mxu0
      %v657 = vadd.f32 0.0, %v656
      %658 = vmatmul.f32.gmra.mxu0 %v613
      %v659 = vpop.f32.mrf.mxu0
      %v660 = vadd.f32 0.0, %v659
      %661 = vmatmul.f32.gmra.mxu0 %v616
      %v662 = vpop.f32.mrf.mxu0
      %v663 = vadd.f32 0.0, %v662
      %664 = vmatmul.f32.gmra.mxu0 %v619
      %v665 = vpop.f32.mrf.mxu0
      %v666 = vadd.f32 0.0, %v665
      %667 = vdwg.mxu0
      %v668 = vadd.f32 %v583, %v642
      %v669 = vadd.f32 %v584, %v645
      %v670 = vadd.f32 %v585, %v648
      %v671 = vadd.f32 %v586, %v651
      %v672 = vadd.f32 %v587, %v654
      %v673 = vadd.f32 %v588, %v657
      %v674 = vadd.f32 %v589, %v660
      %v675 = vadd.f32 %v590, %v663
      %v676 = vadd.f32 %v591, %v666
      %677 = vst [vmem:[#allocation2] sm:$0xff] %v668
      %678 = vst [vmem:[#allocation2 + $0x8] sm:$0xff] %v669
      %679 = vst [vmem:[#allocation2 + $0x10] sm:$0xff] %v670
      %680 = vst [vmem:[#allocation2 + $0x18] sm:$0xff] %v671
      %681 = vst [vmem:[#allocation2 + $0x20] sm:$0xff] %v672
      %682 = vst [vmem:[#allocation2 + $0x28] sm:$0xff] %v673
      %683 = vst [vmem:[#allocation2 + $0x30] sm:$0xff] %v674
      %684 = vst [vmem:[#allocation2 + $0x38] sm:$0xff] %v675
      %685 = vst [vmem:[#allocation2 + $0x40] sm:$0xff] %v676
      %s686 = scalar_lea.vmem %s206, 288
      %v687 = vld [vmem:[%s686] sm:$0xff]
      %v688 = vld [vmem:[%s686 + $0x8] sm:$0xff]
      %v689 = vld [vmem:[%s686 + $0x10] sm:$0xff]
      %v690 = vld [vmem:[%s686 + $0x18] sm:$0xff]
      %v691 = vld [vmem:[%s686 + $0x20] sm:$0xff]
      %v692 = vld [vmem:[%s686 + $0x28] sm:$0xff]
      %v693 = vld [vmem:[%s686 + $0x30] sm:$0xff]
      %v694 = vld [vmem:[%s686 + $0x38] sm:$0xff]
      %v695 = vld [vmem:[%s686 + $0x40] sm:$0xff]
      %v696 = vld [vmem:[#allocation2] sm:$0xff]
      %v697 = vld [vmem:[#allocation2 + $0x8] sm:$0xff]
      %v698 = vld [vmem:[#allocation2 + $0x10] sm:$0xff]
      %v699 = vld [vmem:[#allocation2 + $0x18] sm:$0xff]
      %v700 = vld [vmem:[#allocation2 + $0x20] sm:$0xff]
      %v701 = vld [vmem:[#allocation2 + $0x28] sm:$0xff]
      %v702 = vld [vmem:[#allocation2 + $0x30] sm:$0xff]
      %v703 = vld [vmem:[#allocation2 + $0x38] sm:$0xff]
      %v704 = vld [vmem:[#allocation2 + $0x40] sm:$0xff]
      %s705 = scalar_lea.vmem %s210, 16
      %v706 = vld [vmem:[%s705] sm:$0xf]
      %v708 = vsel %vm254, %v687, 0
      %v711 = vsel %vm254, %v688, 0
      %v714 = vsel %vm254, %v689, 0
      %v717 = vsel %vm254, %v690, 0
      %v720 = vsel %vm254, %v691, 0
      %v723 = vsel %vm254, %v692, 0
      %v726 = vsel %vm254, %v693, 0
      %v729 = vsel %vm254, %v694, 0
      %v732 = vsel %vm254, %v695, 0
      %v735 = vsel %vm282, %v706, 0
      %737 = vmatpush.msra.mxu0 0.0
      %738 = vmatpush.msra.mxu0 0.0
      %739 = vmatpush.msra.mxu0 0.0
      %740 = vmatpush.msra.mxu0 0.0
      %741 = vmatpush.msra.mxu0 0.0
      %742 = vmatpush.msra.mxu0 0.0
      %743 = vmatpush.msra.mxu0 0.0
      %744 = vmatpush.msra.mxu0 0.0
      %745 = vmatpush.msra.mxu0 0.0
      %746 = vmatpush.msra.mxu0 0.0
      %747 = vmatpush.msra.mxu0 0.0
      %748 = vmatpush.msra.mxu0 0.0
      %749 = vmatpush.msra.mxu0 0.0
      %750 = vmatpush.msra.mxu0 0.0
      %751 = vmatpush.msra.mxu0 0.0
      %752 = vmatpush.msra.mxu0 %v735
      %753 = vmatmul.f32.gmra.mxu0 %v708
      %v754 = vpop.f32.mrf.mxu0
      %v755 = vadd.f32 0.0, %v754
      %756 = vmatmul.f32.gmra.mxu0 %v711
      %v757 = vpop.f32.mrf.mxu0
      %v758 = vadd.f32 0.0, %v757
      %759 = vmatmul.f32.gmra.mxu0 %v714
      %v760 = vpop.f32.mrf.mxu0
      %v761 = vadd.f32 0.0, %v760
      %762 = vmatmul.f32.gmra.mxu0 %v717
      %v763 = vpop.f32.mrf.mxu0
      %v764 = vadd.f32 0.0, %v763
      %765 = vmatmul.f32.gmra.mxu0 %v720
      %v766 = vpop.f32.mrf.mxu0
      %v767 = vadd.f32 0.0, %v766
      %768 = vmatmul.f32.gmra.mxu0 %v723
      %v769 = vpop.f32.mrf.mxu0
      %v770 = vadd.f32 0.0, %v769
      %771 = vmatmul.f32.gmra.mxu0 %v726
      %v772 = vpop.f32.mrf.mxu0
      %v773 = vadd.f32 0.0, %v772
      %774 = vmatmul.f32.gmra.mxu0 %v729
      %v775 = vpop.f32.mrf.mxu0
      %v776 = vadd.f32 0.0, %v775
      %777 = vmatmul.f32.gmra.mxu0 %v732
      %v778 = vpop.f32.mrf.mxu0
      %v779 = vadd.f32 0.0, %v778
      %780 = vdwg.mxu0
      %v781 = vadd.f32 %v696, %v755
      %v782 = vadd.f32 %v697, %v758
      %v783 = vadd.f32 %v698, %v761
      %v784 = vadd.f32 %v699, %v764
      %v785 = vadd.f32 %v700, %v767
      %v786 = vadd.f32 %v701, %v770
      %v787 = vadd.f32 %v702, %v773
      %v788 = vadd.f32 %v703, %v776
      %v789 = vadd.f32 %v704, %v779
      %790 = vst [vmem:[#allocation2] sm:$0xff] %v781
      %791 = vst [vmem:[#allocation2 + $0x8] sm:$0xff] %v782
      %792 = vst [vmem:[#allocation2 + $0x10] sm:$0xff] %v783
      %793 = vst [vmem:[#allocation2 + $0x18] sm:$0xff] %v784
      %794 = vst [vmem:[#allocation2 + $0x20] sm:$0xff] %v785
      %795 = vst [vmem:[#allocation2 + $0x28] sm:$0xff] %v786
      %796 = vst [vmem:[#allocation2 + $0x30] sm:$0xff] %v787
      %797 = vst [vmem:[#allocation2 + $0x38] sm:$0xff] %v788
      %798 = vst [vmem:[#allocation2 + $0x40] sm:$0xff] %v789
      %v799 = vld [vmem:[%s573 + $0x1] sm:$0xff]
      %v800 = vld [vmem:[%s573 + $0x9] sm:$0xff]
      %v801 = vld [vmem:[%s573 + $0x11] sm:$0xff]
      %v802 = vld [vmem:[%s573 + $0x19] sm:$0xff]
      %v803 = vld [vmem:[%s573 + $0x21] sm:$0xff]
      %v804 = vld [vmem:[%s573 + $0x29] sm:$0xff]
      %v805 = vld [vmem:[%s573 + $0x31] sm:$0xff]
      %v806 = vld [vmem:[%s573 + $0x39] sm:$0xff]
      %v807 = vld [vmem:[%s573 + $0x41] sm:$0xff]
      %v808 = vld [vmem:[#allocation2] sm:$0xff]
      %v809 = vld [vmem:[#allocation2 + $0x8] sm:$0xff]
      %v810 = vld [vmem:[#allocation2 + $0x10] sm:$0xff]
      %v811 = vld [vmem:[#allocation2 + $0x18] sm:$0xff]
      %v812 = vld [vmem:[#allocation2 + $0x20] sm:$0xff]
      %v813 = vld [vmem:[#allocation2 + $0x28] sm:$0xff]
      %v814 = vld [vmem:[#allocation2 + $0x30] sm:$0xff]
      %v815 = vld [vmem:[#allocation2 + $0x38] sm:$0xff]
      %v816 = vld [vmem:[#allocation2 + $0x40] sm:$0xff]
      %s817 = scalar_lea.vmem %s210, 20
      %v818 = vld [vmem:[%s817] sm:$0xf]
      %v820 = vsel %vm254, %v799, 0
      %v823 = vsel %vm254, %v800, 0
      %v826 = vsel %vm254, %v801, 0
      %v829 = vsel %vm254, %v802, 0
      %v832 = vsel %vm254, %v803, 0
      %v835 = vsel %vm254, %v804, 0
      %v838 = vsel %vm254, %v805, 0
      %v841 = vsel %vm254, %v806, 0
      %v844 = vsel %vm254, %v807, 0
      %v847 = vsel %vm282, %v818, 0
      %849 = vmatpush.msra.mxu0 0.0
      %850 = vmatpush.msra.mxu0 0.0
      %851 = vmatpush.msra.mxu0 0.0
      %852 = vmatpush.msra.mxu0 0.0
      %853 = vmatpush.msra.mxu0 0.0
      %854 = vmatpush.msra.mxu0 0.0
      %855 = vmatpush.msra.mxu0 0.0
      %856 = vmatpush.msra.mxu0 0.0
      %857 = vmatpush.msra.mxu0 0.0
      %858 = vmatpush.msra.mxu0 0.0
      %859 = vmatpush.msra.mxu0 0.0
      %860 = vmatpush.msra.mxu0 0.0
      %861 = vmatpush.msra.mxu0 0.0
      %862 = vmatpush.msra.mxu0 0.0
      %863 = vmatpush.msra.mxu0 0.0
      %864 = vmatpush.msra.mxu0 %v847
      %865 = vmatmul.f32.gmra.mxu0 %v820
      %v866 = vpop.f32.mrf.mxu0
      %v867 = vadd.f32 0.0, %v866
      %868 = vmatmul.f32.gmra.mxu0 %v823
      %v869 = vpop.f32.mrf.mxu0
      %v870 = vadd.f32 0.0, %v869
      %871 = vmatmul.f32.gmra.mxu0 %v826
      %v872 = vpop.f32.mrf.mxu0
      %v873 = vadd.f32 0.0, %v872
      %874 = vmatmul.f32.gmra.mxu0 %v829
      %v875 = vpop.f32.mrf.mxu0
      %v876 = vadd.f32 0.0, %v875
      %877 = vmatmul.f32.gmra.mxu0 %v832
      %v878 = vpop.f32.mrf.mxu0
      %v879 = vadd.f32 0.0, %v878
      %880 = vmatmul.f32.gmra.mxu0 %v835
      %v881 = vpop.f32.mrf.mxu0
      %v882 = vadd.f32 0.0, %v881
      %883 = vmatmul.f32.gmra.mxu0 %v838
      %v884 = vpop.f32.mrf.mxu0
      %v885 = vadd.f32 0.0, %v884
      %886 = vmatmul.f32.gmra.mxu0 %v841
      %v887 = vpop.f32.mrf.mxu0
      %v888 = vadd.f32 0.0, %v887
      %889 = vmatmul.f32.gmra.mxu0 %v844
      %v890 = vpop.f32.mrf.mxu0
      %v891 = vadd.f32 0.0, %v890
      %892 = vdwg.mxu0
      %v893 = vadd.f32 %v808, %v867
      %v894 = vadd.f32 %v809, %v870
      %v895 = vadd.f32 %v810, %v873
      %v896 = vadd.f32 %v811, %v876
      %v897 = vadd.f32 %v812, %v879
      %v898 = vadd.f32 %v813, %v882
      %v899 = vadd.f32 %v814, %v885
      %v900 = vadd.f32 %v815, %v888
      %v901 = vadd.f32 %v816, %v891
      %902 = vst [vmem:[#allocation2] sm:$0xff] %v893
      %903 = vst [vmem:[#allocation2 + $0x8] sm:$0xff] %v894
      %904 = vst [vmem:[#allocation2 + $0x10] sm:$0xff] %v895
      %905 = vst [vmem:[#allocation2 + $0x18] sm:$0xff] %v896
      %906 = vst [vmem:[#allocation2 + $0x20] sm:$0xff] %v897
      %907 = vst [vmem:[#allocation2 + $0x28] sm:$0xff] %v898
      %908 = vst [vmem:[#allocation2 + $0x30] sm:$0xff] %v899
      %909 = vst [vmem:[#allocation2 + $0x38] sm:$0xff] %v900
      %910 = vst [vmem:[#allocation2 + $0x40] sm:$0xff] %v901
      %v911 = vld [vmem:[%s206 + $0x9] sm:$0xff]
      %v912 = vld [vmem:[%s206 + $0x11] sm:$0xff]
      %v913 = vld [vmem:[%s206 + $0x19] sm:$0xff]
      %v914 = vld [vmem:[%s206 + $0x21] sm:$0xff]
      %v915 = vld [vmem:[%s206 + $0x29] sm:$0xff]
      %v916 = vld [vmem:[%s206 + $0x31] sm:$0xff]
      %v917 = vld [vmem:[%s206 + $0x39] sm:$0xff]
      %v918 = vld [vmem:[%s206 + $0x41] sm:$0xff]
      %v919 = vld [vmem:[%s206 + $0x49] sm:$0xff]
      %v920 = vld [vmem:[#allocation2] sm:$0xff]
      %v921 = vld [vmem:[#allocation2 + $0x8] sm:$0xff]
      %v922 = vld [vmem:[#allocation2 + $0x10] sm:$0xff]
      %v923 = vld [vmem:[#allocation2 + $0x18] sm:$0xff]
      %v924 = vld [vmem:[#allocation2 + $0x20] sm:$0xff]
      %v925 = vld [vmem:[#allocation2 + $0x28] sm:$0xff]
      %v926 = vld [vmem:[#allocation2 + $0x30] sm:$0xff]
      %v927 = vld [vmem:[#allocation2 + $0x38] sm:$0xff]
      %v928 = vld [vmem:[#allocation2 + $0x40] sm:$0xff]
      %s929 = scalar_lea.vmem %s210, 24
      %v930 = vld [vmem:[%s929] sm:$0xf]
      %v932 = vsel %vm254, %v911, 0
      %v935 = vsel %vm254, %v912, 0
      %v938 = vsel %vm254, %v913, 0
      %v941 = vsel %vm254, %v914, 0
      %v944 = vsel %vm254, %v915, 0
      %v947 = vsel %vm254, %v916, 0
      %v950 = vsel %vm254, %v917, 0
      %v953 = vsel %vm254, %v918, 0
      %v956 = vsel %vm254, %v919, 0
      %v959 = vsel %vm282, %v930, 0
      %961 = vmatpush.msra.mxu0 0.0
      %962 = vmatpush.msra.mxu0 0.0
      %963 = vmatpush.msra.mxu0 0.0
      %964 = vmatpush.msra.mxu0 0.0
      %965 = vmatpush.msra.mxu0 0.0
      %966 = vmatpush.msra.mxu0 0.0
      %967 = vmatpush.msra.mxu0 0.0
      %968 = vmatpush.msra.mxu0 0.0
      %969 = vmatpush.msra.mxu0 0.0
      %970 = vmatpush.msra.mxu0 0.0
      %971 = vmatpush.msra.mxu0 0.0
      %972 = vmatpush.msra.mxu0 0.0
      %973 = vmatpush.msra.mxu0 0.0
      %974 = vmatpush.msra.mxu0 0.0
      %975 = vmatpush.msra.mxu0 0.0
      %976 = vmatpush.msra.mxu0 %v959
      %977 = vmatmul.f32.gmra.mxu0 %v932
      %v978 = vpop.f32.mrf.mxu0
      %v979 = vadd.f32 0.0, %v978
      %980 = vmatmul.f32.gmra.mxu0 %v935
      %v981 = vpop.f32.mrf.mxu0
      %v982 = vadd.f32 0.0, %v981
      %983 = vmatmul.f32.gmra.mxu0 %v938
      %v984 = vpop.f32.mrf.mxu0
      %v985 = vadd.f32 0.0, %v984
      %986 = vmatmul.f32.gmra.mxu0 %v941
      %v987 = vpop.f32.mrf.mxu0
      %v988 = vadd.f32 0.0, %v987
      %989 = vmatmul.f32.gmra.mxu0 %v944
      %v990 = vpop.f32.mrf.mxu0
      %v991 = vadd.f32 0.0, %v990
      %992 = vmatmul.f32.gmra.mxu0 %v947
      %v993 = vpop.f32.mrf.mxu0
      %v994 = vadd.f32 0.0, %v993
      %995 = vmatmul.f32.gmra.mxu0 %v950
      %v996 = vpop.f32.mrf.mxu0
      %v997 = vadd.f32 0.0, %v996
      %998 = vmatmul.f32.gmra.mxu0 %v953
      %v999 = vpop.f32.mrf.mxu0
      %v1000 = vadd.f32 0.0, %v999
      %1001 = vmatmul.f32.gmra.mxu0 %v956
      %v1002 = vpop.f32.mrf.mxu0
      %v1003 = vadd.f32 0.0, %v1002
      %1004 = vdwg.mxu0
      %v1005 = vadd.f32 %v920, %v979
      %v1006 = vadd.f32 %v921, %v982
      %v1007 = vadd.f32 %v922, %v985
      %v1008 = vadd.f32 %v923, %v988
      %v1009 = vadd.f32 %v924, %v991
      %v1010 = vadd.f32 %v925, %v994
      %v1011 = vadd.f32 %v926, %v997
      %v1012 = vadd.f32 %v927, %v1000
      %v1013 = vadd.f32 %v928, %v1003
      %1014 = vst [vmem:[#allocation2] sm:$0xff] %v1005
      %1015 = vst [vmem:[#allocation2 + $0x8] sm:$0xff] %v1006
      %1016 = vst [vmem:[#allocation2 + $0x10] sm:$0xff] %v1007
      %1017 = vst [vmem:[#allocation2 + $0x18] sm:$0xff] %v1008
      %1018 = vst [vmem:[#allocation2 + $0x20] sm:$0xff] %v1009
      %1019 = vst [vmem:[#allocation2 + $0x28] sm:$0xff] %v1010
      %1020 = vst [vmem:[#allocation2 + $0x30] sm:$0xff] %v1011
      %1021 = vst [vmem:[#allocation2 + $0x38] sm:$0xff] %v1012
      %1022 = vst [vmem:[#allocation2 + $0x40] sm:$0xff] %v1013
      %v1023 = vld [vmem:[%s348 + $0x9] sm:$0xff]
      %v1024 = vld [vmem:[%s348 + $0x11] sm:$0xff]
      %v1025 = vld [vmem:[%s348 + $0x19] sm:$0xff]
      %v1026 = vld [vmem:[%s348 + $0x21] sm:$0xff]
      %v1027 = vld [vmem:[%s348 + $0x29] sm:$0xff]
      %v1028 = vld [vmem:[%s348 + $0x31] sm:$0xff]
      %v1029 = vld [vmem:[%s348 + $0x39] sm:$0xff]
      %v1030 = vld [vmem:[%s348 + $0x41] sm:$0xff]
      %v1031 = vld [vmem:[%s348 + $0x49] sm:$0xff]
      %v1032 = vld [vmem:[#allocation2] sm:$0xff]
      %v1033 = vld [vmem:[#allocation2 + $0x8] sm:$0xff]
      %v1034 = vld [vmem:[#allocation2 + $0x10] sm:$0xff]
      %v1035 = vld [vmem:[#allocation2 + $0x18] sm:$0xff]
      %v1036 = vld [vmem:[#allocation2 + $0x20] sm:$0xff]
      %v1037 = vld [vmem:[#allocation2 + $0x28] sm:$0xff]
      %v1038 = vld [vmem:[#allocation2 + $0x30] sm:$0xff]
      %v1039 = vld [vmem:[#allocation2 + $0x38] sm:$0xff]
      %v1040 = vld [vmem:[#allocation2 + $0x40] sm:$0xff]
      %s1041 = scalar_lea.vmem %s210, 28
      %v1042 = vld [vmem:[%s1041] sm:$0xf]
      %v1044 = vsel %vm254, %v1023, 0
      %v1047 = vsel %vm254, %v1024, 0
      %v1050 = vsel %vm254, %v1025, 0
      %v1053 = vsel %vm254, %v1026, 0
      %v1056 = vsel %vm254, %v1027, 0
      %v1059 = vsel %vm254, %v1028, 0
      %v1062 = vsel %vm254, %v1029, 0
      %v1065 = vsel %vm254, %v1030, 0
      %v1068 = vsel %vm254, %v1031, 0
      %v1071 = vsel %vm282, %v1042, 0
      %1073 = vmatpush.msra.mxu0 0.0
      %1074 = vmatpush.msra.mxu0 0.0
      %1075 = vmatpush.msra.mxu0 0.0
      %1076 = vmatpush.msra.mxu0 0.0
      %1077 = vmatpush.msra.mxu0 0.0
      %1078 = vmatpush.msra.mxu0 0.0
      %1079 = vmatpush.msra.mxu0 0.0
      %1080 = vmatpush.msra.mxu0 0.0
      %1081 = vmatpush.msra.mxu0 0.0
      %1082 = vmatpush.msra.mxu0 0.0
      %1083 = vmatpush.msra.mxu0 0.0
      %1084 = vmatpush.msra.mxu0 0.0
      %1085 = vmatpush.msra.mxu0 0.0
      %1086 = vmatpush.msra.mxu0 0.0
      %1087 = vmatpush.msra.mxu0 0.0
      %1088 = vmatpush.msra.mxu0 %v1071
      %1089 = vmatmul.f32.gmra.mxu0 %v1044
      %v1090 = vpop.f32.mrf.mxu0
      %v1091 = vadd.f32 0.0, %v1090
      %1092 = vmatmul.f32.gmra.mxu0 %v1047
      %v1093 = vpop.f32.mrf.mxu0
      %v1094 = vadd.f32 0.0, %v1093
      %1095 = vmatmul.f32.gmra.mxu0 %v1050
      %v1096 = vpop.f32.mrf.mxu0
      %v1097 = vadd.f32 0.0, %v1096
      %1098 = vmatmul.f32.gmra.mxu0 %v1053
      %v1099 = vpop.f32.mrf.mxu0
      %v1100 = vadd.f32 0.0, %v1099
      %1101 = vmatmul.f32.gmra.mxu0 %v1056
      %v1102 = vpop.f32.mrf.mxu0
      %v1103 = vadd.f32 0.0, %v1102
      %1104 = vmatmul.f32.gmra.mxu0 %v1059
      %v1105 = vpop.f32.mrf.mxu0
      %v1106 = vadd.f32 0.0, %v1105
      %1107 = vmatmul.f32.gmra.mxu0 %v1062
      %v1108 = vpop.f32.mrf.mxu0
      %v1109 = vadd.f32 0.0, %v1108
      %1110 = vmatmul.f32.gmra.mxu0 %v1065
      %v1111 = vpop.f32.mrf.mxu0
      %v1112 = vadd.f32 0.0, %v1111
      %1113 = vmatmul.f32.gmra.mxu0 %v1068
      %v1114 = vpop.f32.mrf.mxu0
      %v1115 = vadd.f32 0.0, %v1114
      %1116 = vdwg.mxu0
      %v1117 = vadd.f32 %v1032, %v1091
      %v1118 = vadd.f32 %v1033, %v1094
      %v1119 = vadd.f32 %v1034, %v1097
      %v1120 = vadd.f32 %v1035, %v1100
      %v1121 = vadd.f32 %v1036, %v1103
      %v1122 = vadd.f32 %v1037, %v1106
      %v1123 = vadd.f32 %v1038, %v1109
      %v1124 = vadd.f32 %v1039, %v1112
      %v1125 = vadd.f32 %v1040, %v1115
      %1126 = vst [vmem:[#allocation2] sm:$0xff] %v1117
      %1127 = vst [vmem:[#allocation2 + $0x8] sm:$0xff] %v1118
      %1128 = vst [vmem:[#allocation2 + $0x10] sm:$0xff] %v1119
      %1129 = vst [vmem:[#allocation2 + $0x18] sm:$0xff] %v1120
      %1130 = vst [vmem:[#allocation2 + $0x20] sm:$0xff] %v1121
      %1131 = vst [vmem:[#allocation2 + $0x28] sm:$0xff] %v1122
      %1132 = vst [vmem:[#allocation2 + $0x30] sm:$0xff] %v1123
      %1133 = vst [vmem:[#allocation2 + $0x38] sm:$0xff] %v1124
      %1134 = vst [vmem:[#allocation2 + $0x40] sm:$0xff] %v1125
      %v1135 = vld [vmem:[%s206 + $0xa] sm:$0xff]
      %v1136 = vld [vmem:[%s206 + $0x12] sm:$0xff]
      %v1137 = vld [vmem:[%s206 + $0x1a] sm:$0xff]
      %v1138 = vld [vmem:[%s206 + $0x22] sm:$0xff]
      %v1139 = vld [vmem:[%s206 + $0x2a] sm:$0xff]
      %v1140 = vld [vmem:[%s206 + $0x32] sm:$0xff]
      %v1141 = vld [vmem:[%s206 + $0x3a] sm:$0xff]
      %v1142 = vld [vmem:[%s206 + $0x42] sm:$0xff]
      %v1143 = vld [vmem:[%s206 + $0x4a] sm:$0xff]
      %v1144 = vld [vmem:[#allocation2] sm:$0xff]
      %v1145 = vld [vmem:[#allocation2 + $0x8] sm:$0xff]
      %v1146 = vld [vmem:[#allocation2 + $0x10] sm:$0xff]
      %v1147 = vld [vmem:[#allocation2 + $0x18] sm:$0xff]
      %v1148 = vld [vmem:[#allocation2 + $0x20] sm:$0xff]
      %v1149 = vld [vmem:[#allocation2 + $0x28] sm:$0xff]
      %v1150 = vld [vmem:[#allocation2 + $0x30] sm:$0xff]
      %v1151 = vld [vmem:[#allocation2 + $0x38] sm:$0xff]
      %v1152 = vld [vmem:[#allocation2 + $0x40] sm:$0xff]
      %s1153 = scalar_lea.vmem %s210, 32
      %v1154 = vld [vmem:[%s1153] sm:$0xf]
      %v1156 = vsel %vm254, %v1135, 0
      %v1159 = vsel %vm254, %v1136, 0
      %v1162 = vsel %vm254, %v1137, 0
      %v1165 = vsel %vm254, %v1138, 0
      %v1168 = vsel %vm254, %v1139, 0
      %v1171 = vsel %vm254, %v1140, 0
      %v1174 = vsel %vm254, %v1141, 0
      %v1177 = vsel %vm254, %v1142, 0
      %v1180 = vsel %vm254, %v1143, 0
      %v1183 = vsel %vm282, %v1154, 0
      %1185 = vmatpush.msra.mxu0 0.0
      %1186 = vmatpush.msra.mxu0 0.0
      %1187 = vmatpush.msra.mxu0 0.0
      %1188 = vmatpush.msra.mxu0 0.0
      %1189 = vmatpush.msra.mxu0 0.0
      %1190 = vmatpush.msra.mxu0 0.0
      %1191 = vmatpush.msra.mxu0 0.0
      %1192 = vmatpush.msra.mxu0 0.0
      %1193 = vmatpush.msra.mxu0 0.0
      %1194 = vmatpush.msra.mxu0 0.0
      %1195 = vmatpush.msra.mxu0 0.0
      %1196 = vmatpush.msra.mxu0 0.0
      %1197 = vmatpush.msra.mxu0 0.0
      %1198 = vmatpush.msra.mxu0 0.0
      %1199 = vmatpush.msra.mxu0 0.0
      %1200 = vmatpush.msra.mxu0 %v1183
      %1201 = vmatmul.f32.gmra.mxu0 %v1156
      %v1202 = vpop.f32.mrf.mxu0
      %v1203 = vadd.f32 0.0, %v1202
      %1204 = vmatmul.f32.gmra.mxu0 %v1159
      %v1205 = vpop.f32.mrf.mxu0
      %v1206 = vadd.f32 0.0, %v1205
      %1207 = vmatmul.f32.gmra.mxu0 %v1162
      %v1208 = vpop.f32.mrf.mxu0
      %v1209 = vadd.f32 0.0, %v1208
      %1210 = vmatmul.f32.gmra.mxu0 %v1165
      %v1211 = vpop.f32.mrf.mxu0
      %v1212 = vadd.f32 0.0, %v1211
      %1213 = vmatmul.f32.gmra.mxu0 %v1168
      %v1214 = vpop.f32.mrf.mxu0
      %v1215 = vadd.f32 0.0, %v1214
      %1216 = vmatmul.f32.gmra.mxu0 %v1171
      %v1217 = vpop.f32.mrf.mxu0
      %v1218 = vadd.f32 0.0, %v1217
      %1219 = vmatmul.f32.gmra.mxu0 %v1174
      %v1220 = vpop.f32.mrf.mxu0
      %v1221 = vadd.f32 0.0, %v1220
      %1222 = vmatmul.f32.gmra.mxu0 %v1177
      %v1223 = vpop.f32.mrf.mxu0
      %v1224 = vadd.f32 0.0, %v1223
      %1225 = vmatmul.f32.gmra.mxu0 %v1180
      %v1226 = vpop.f32.mrf.mxu0
      %v1227 = vadd.f32 0.0, %v1226
      %1228 = vdwg.mxu0
      %v1229 = vadd.f32 %v1144, %v1203
      %v1230 = vadd.f32 %v1145, %v1206
      %v1231 = vadd.f32 %v1146, %v1209
      %v1232 = vadd.f32 %v1147, %v1212
      %v1233 = vadd.f32 %v1148, %v1215
      %v1234 = vadd.f32 %v1149, %v1218
      %v1235 = vadd.f32 %v1150, %v1221
      %v1236 = vadd.f32 %v1151, %v1224
      %v1237 = vadd.f32 %v1152, %v1227
      %1238 = vst [vmem:[#allocation2] sm:$0xff] %v1229
      %1239 = vst [vmem:[#allocation2 + $0x8] sm:$0xff] %v1230
      %1240 = vst [vmem:[#allocation2 + $0x10] sm:$0xff] %v1231
      %1241 = vst [vmem:[#allocation2 + $0x18] sm:$0xff] %v1232
      %1242 = vst [vmem:[#allocation2 + $0x20] sm:$0xff] %v1233
      %1243 = vst [vmem:[#allocation2 + $0x28] sm:$0xff] %v1234
      %1244 = vst [vmem:[#allocation2 + $0x30] sm:$0xff] %v1235
      %1245 = vst [vmem:[#allocation2 + $0x38] sm:$0xff] %v1236
      %1246 = vst [vmem:[#allocation2 + $0x40] sm:$0xff] %v1237
      %v1247 = vld [vmem:[#allocation2] sm:$0xff]
      %v1248 = vld [vmem:[#allocation2 + $0x8] sm:$0xff]
      %v1249 = vld [vmem:[#allocation2 + $0x10] sm:$0xff]
      %v1250 = vld [vmem:[#allocation2 + $0x18] sm:$0xff]
      %v1251 = vld [vmem:[#allocation2 + $0x20] sm:$0xff]
      %v1252 = vld [vmem:[#allocation2 + $0x28] sm:$0xff]
      %v1253 = vld [vmem:[#allocation2 + $0x30] sm:$0xff]
      %v1254 = vld [vmem:[#allocation2 + $0x38] sm:$0xff]
      %v1255 = vld [vmem:[#allocation2 + $0x40] sm:$0xff]
      %1256 = vst [vmem:[%s221] sm:$0xff] %v1247
      %1257 = vst [vmem:[%s221 + $0x8] sm:$0xff] %v1248
      %1258 = vst [vmem:[%s221 + $0x10] sm:$0xff] %v1249
      %1259 = vst [vmem:[%s221 + $0x18] sm:$0xff] %v1250
      %1260 = vst [vmem:[%s221 + $0x20] sm:$0xff] %v1251
      %1261 = vst [vmem:[%s221 + $0x28] sm:$0xff] %v1252
      %1262 = vst [vmem:[%s221 + $0x30] sm:$0xff] %v1253
      %1263 = vst [vmem:[%s221 + $0x38] sm:$0xff] %v1254
      %1264 = vst [vmem:[%s221 + $0x40] sm:$0xff] %v1255
      %p1265 = scmp.lt.s32.totalorder %s18, 1
      %s1266 = scalar_select %p1265, %s18, 1
      %p1267 = scmp.lt.s32.totalorder %s19, 0
      %s1268 = scalar_select %p1267, %s19, 0
      %s1269 = smul.addr %s1266, 9
      %s1270 = sadd.s32 %s1268, %s1269
      %s1271 = smul.addr %s1270, 8
      %s1272 = scalar_lea.vmem %s3, %s1271
      // Predicated region
      $region33: #{downsample_conv2d.1} parent=31 // pred_check
        %p1273 = pneg %p124
      $region34: #{downsample_conv2d.1} parent=31 // pred_check_branch
        %1275 = sbr.rel (%p1273) target = $region36
      $region35: #{downsample_conv2d.1} parent=31 // pred_region
        _
      $region36: #{downsample_conv2d.1} parent=31 // pred_fallthru
        _
    $region32: #{downsample_conv2d.1} parent=5 // pred_fallthru
      _
    %p1276 = scmp.le.s32.totalorder 2, %s9
    // Predicated region
    $region37: #{downsample_conv2d.1} parent=5 // pred_check
      %p1277 = pneg %p1276
    $region38: #{downsample_conv2d.1} parent=5 // pred_check_branch
      %1279 = sbr.rel (%p1277) target = $region40
    $region39: #{downsample_conv2d.1} parent=5 // pred_region
      %s1280 = ssub.s32 %s9, 2
      // Predicated region
      $region41: #{downsample_conv2d.1} parent=39 // pred_check
        %p1281 = pneg %p130
      $region42: #{downsample_conv2d.1} parent=39 // pred_check_branch
        %1283 = sbr.rel (%p1281) target = $region44
      $region43: #{downsample_conv2d.1} parent=39 // pred_region
        %p1284 = scmp.lt.s32.totalorder %s20, 1
        %s1285 = scalar_select %p1284, %s20, 1
        %p1286 = scmp.lt.s32.totalorder %s21, 0
        %s1287 = scalar_select %p1286, %s21, 0
        %s1288 = smul.addr %s1285, 9
        %s1289 = sadd.s32 %s1287, %s1288
        %s1290 = smul.addr %s1289, 8
        %s1291 = scalar_lea.vmem %s3, %s1290
      $region44: #{downsample_conv2d.1} parent=39 // pred_fallthru
        _
    $region40: #{downsample_conv2d.1} parent=5 // pred_fallthru
      _
  $region6: #{downsample_conv2d.1} parent=0 // loop_footer
    %s13 = sadd.s32 1, %s9
  $region7: #{downsample_conv2d.1} parent=0 // loop_footer_branch
    %8 = sbr.rel target = $region3
  $region8: #{downsample_conv2d.1} parent=0 // loop_exit
    _

</llo_original>
